<compile_context>
chip_gen: v7x
topology: tpu7x:2x2x1
jax: 0.10.0
libtpu: 0.0.40
codegen_flags: <defaults>
</compile_context>

<pallas_src>
import functools

import jax
import jax.numpy as jnp
import numpy as np
from jax.experimental import pallas as pl
from jax.experimental.pallas import tpu as pltpu

EPS = 1e-5


def up_block_kernel(x_ref, mup_ref, mdn_ref, g1_ref, b1_ref, p1_ref,
                    w1_ref, cb1_ref, w2_ref, cb2_ref, g2_ref, b2_ref, p2_ref,
                    o_ref, *, N, H, W):
    """Fused BN -> conv3x3 -> ReLU -> conv3x3 -> ReLU -> BN -> ReLU.

    x_ref        : (N*H, W*Cin)   f32   lane-dense activations
    mup/mdn_ref  : (N*H, 1)       f32   image-boundary row masks for the H shifts
    w*_ref       : (3, K, W*Cout) or (3*K, W*Cout)  bf16  banded conv weights
    p*_ref       : (L, L)         f32   channel-pooling matrices for BN stats
    g*/b*/cb*    : (1, L)         f32   per-lane (pre-tiled) BN / bias params
    o_ref        : (N*H, W*Cout)  f32   output in pixel-shuffle lane order
    """
    NH = N * H
    inv_cnt = 1.0 / float(N * H * W)
    f32, bf16 = jnp.float32, jnp.bfloat16
    mup = mup_ref[...]          # 0.0 on the first row of each image, else 1.0
    mdn = mdn_ref[...]          # 0.0 on the last row of each image, else 1.0

    def chan_stats(a, pool_ref):
        # Single-pass per-channel batch mean / biased variance, replicated back
        # onto the lane axis via one pooled matmul on a stacked (2, L) operand.
        s = jnp.sum(a, axis=0, keepdims=True)
        ss = jnp.sum(a * a, axis=0, keepdims=True)
        pooled = jnp.dot(jnp.concatenate([s, ss], axis=0), pool_ref[...],
                         preferred_element_type=f32) * inv_cnt
        mean = pooled[0:1, :]
        var = jnp.maximum(pooled[1:2, :] - mean * mean, 0.0)  # clamp E[x^2]-E[x]^2
        return mean, var

    def conv3x3(a, w_ref, bias_ref):
        # 'same' padding in H: +/-1 sublane rotate (XLU) + boundary-row mask.
        # kx taps and the W-edge zero padding are folded into the banded weights.
        # Rotation is done on the f32 activation (packed bf16 sublane rotates are
        # avoided for lowering robustness); operands cast to bf16 at the MXU feed.
        up = pltpu.roll(a, 1, axis=0) * mup         # row h-1 (0 at image top)
        dn = pltpu.roll(a, NH - 1, axis=0) * mdn    # row h+1 (0 at image bottom)
        if len(w_ref.shape) == 2:
            # ky taps fused along the contraction dim: one matmul, K = 3*W*C.
            lhs = jnp.concatenate(
                [up.astype(bf16), a.astype(bf16), dn.astype(bf16)], axis=1)
            acc = jnp.dot(lhs, w_ref[...], preferred_element_type=f32)
        else:
            acc = jnp.dot(up.astype(bf16), w_ref[0], preferred_element_type=f32)
            acc = acc + jnp.dot(a.astype(bf16), w_ref[1], preferred_element_type=f32)
            acc = acc + jnp.dot(dn.astype(bf16), w_ref[2], preferred_element_type=f32)
        return jnp.maximum(acc + bias_ref[...], 0.0)

    # ---- BatchNorm #1 (training-mode batch stats) ----
    x = x_ref[...]
    mean1, var1 = chan_stats(x, p1_ref)
    xn = (x - mean1) * (g1_ref[...] * jax.lax.rsqrt(var1 + EPS)) + b1_ref[...]

    # ---- Conv1 + ReLU, Conv2 + ReLU ----
    h1 = conv3x3(xn, w1_ref, cb1_ref)
    h2 = conv3x3(h1, w2_ref, cb2_ref)

    # ---- BatchNorm #2 (batch stats) + ReLU (output already in shuffle order) ----
    mean2, var2 = chan_stats(h2, p2_ref)
    y = (h2 - mean2) * (g2_ref[...] * jax.lax.rsqrt(var2 + EPS)) + b2_ref[...]
    o_ref[...] = jnp.maximum(y, 0.0)


def _band_weights(w, W):
    """(3,3,Cin,Cout) cross-correlation taps -> (3, W*Cin, W*Cout) banded matrices.

    band[ky][wi*Cin+ci, wo*Cout+co] = w[ky, (wi-wo)+1, ci, co] if |wi-wo| <= 1 else 0.
    Folding kx + the W-edge zero padding into the matrix raises the contraction
    depth to W*Cin for good MXU occupancy at small channel counts.
    """
    _, _, Cin, Cout = w.shape
    eyes = jnp.stack([jnp.eye(W, dtype=w.dtype, k=-(kx - 1)) for kx in range(3)], 0)
    blocks = jnp.einsum('xab,yxio->yabio', eyes, w)          # (3, W, W, Cin, Cout)
    return blocks.transpose(0, 1, 3, 2, 4).reshape(3, W * Cin, W * Cout)


def _is_v5_chip():
    try:
        return "v5" in jax.devices()[0].device_kind.lower()
    except Exception:
        return False


def prepare_up_block_params(params, W, upscale_factor):
    """One-time weight/param preparation (hoisted out of the per-call path)."""
    f32, bf16 = jnp.float32, jnp.bfloat16
    Cin, Cout = params["w1"].shape[2], params["w1"].shape[3]
    r = upscale_factor
    assert Cout % (r * r) == 0
    C2 = Cout // (r * r)
    Lin, Lout = W * Cin, W * Cout

    # TODO(synk): the banded kx-folding is only worthwhile while 9*C stays well
    # under the MXU contraction depth; for large channel counts fold kx via lane
    # shifts (pltpu.roll along lanes + edge mask, K = 3*C) or tile the band in W.
    band1 = _band_weights(params["w1"].astype(f32), W)                 # (3, Lin, Lout)
    band2n = _band_weights(params["w2"].astype(f32), W)                # (3, Lout, Lout)
    # Permute conv2 output columns into pixel-shuffle lane order (i, w, j, c2):
    # the kernel output then reshapes zero-copy into the shuffled NHWC map.
    band2 = (band2n.reshape(3, Lout, W, C2, r, r)
             .transpose(0, 1, 4, 2, 5, 3).reshape(3, Lout, Lout))

    # ky-tap fusion: one K=3*W*C matmul when a single tap underfills the 256-deep
    # MXU (v6e/v7x); keep 3x K=W*C matmuls on v5e (128-deep MXU, single vst slot).
    is_v5 = _is_v5_chip()
    w1 = (band1.reshape(3 * Lin, Lout) if (not is_v5 and Lin < 256)
          else band1).astype(bf16)
    w2 = (band2.reshape(3 * Lout, Lout) if (not is_v5 and Lout < 256)
          else band2).astype(bf16)

    def tile_nat(v, C):        # per-channel -> per-lane, natural (w, c) order
        return jnp.broadcast_to(v.reshape(1, C), (W, C)).reshape(1, W * C).astype(f32)

    def tile_perm(v):          # per-channel (c2*r*r+i*r+j) -> lanes (i, w, j, c2)
        t = v.reshape(C2, r, r).transpose(1, 2, 0)                     # (i, j, c2)
        return jnp.broadcast_to(t[:, None, :, :], (r, W, r, C2)).reshape(1, Lout).astype(f32)

    # Channel-pooling matrices: (row-sum vector) @ pool replicates per-channel
    # sums across all lanes of that channel (used for the BN batch statistics).
    ids1 = jnp.broadcast_to(jnp.arange(Cin)[None, :], (W, Cin)).reshape(-1)
    pool1 = (ids1[:, None] == ids1[None, :]).astype(f32)
    i_i = jnp.arange(r).reshape(r, 1, 1, 1)
    j_i = jnp.arange(r).reshape(1, 1, r, 1)
    c_i = jnp.arange(C2).reshape(1, 1, 1, C2)
    ids2 = jnp.broadcast_to((i_i * r + j_i) * C2 + c_i, (r, W, r, C2)).reshape(-1)
    pool2 = (ids2[:, None] == ids2[None, :]).astype(f32)

    return {
        "g1": tile_nat(params["g1"], Cin), "b1": tile_nat(params["b1"], Cin),
        "pool1": pool1, "w1": w1, "cb1": tile_nat(params["cb1"], Cout),
        "w2": w2, "cb2": tile_perm(params["cb2"].reshape(-1)),
        "g2": tile_perm(params["g2"]), "b2": tile_perm(params["b2"]),
        "pool2": pool2,
    }


def up_block_forward(x_nchw, prep, upscale_factor):
    """NCHW in, NCHW out (exactly like the PyTorch module)."""
    N, Cin, H, W = x_nchw.shape
    r = upscale_factor
    NH = N * H
    Lin = W * Cin
    Lout = prep["cb1"].shape[-1]
    Cout = Lout // W
    C2 = Cout // (r * r)
    f32 = jnp.float32

    # Lane-dense activations (N*H, W*Cin). TODO(synk): accept NHWC / lane-dense
    # activations upstream to drop this relayout; allow_input_fusion below lets
    # XLA fold it into the kernel input instead of a separate HBM round trip.
    x2 = jnp.transpose(x_nchw, (0, 2, 3, 1)).reshape(NH, Lin).astype(f32)

    # Image-boundary row masks for the +/-1 sublane rolls inside the kernel.
    h_idx = jnp.arange(NH, dtype=jnp.int32) % H
    mup = (h_idx != 0).astype(f32).reshape(NH, 1)
    mdn = (h_idx != H - 1).astype(f32).reshape(NH, 1)

    args = (x2, mup, mdn, prep["g1"], prep["b1"], prep["pool1"], prep["w1"],
            prep["cb1"], prep["w2"], prep["cb2"], prep["g2"], prep["b2"],
            prep["pool2"])

    # VMEM residency: inputs + output + ~14 activation-sized in-kernel
    # temporaries (xn, up/dn, bf16 casts/concat, accumulators, h1, h2, y),
    # capped well below physical VMEM (re-derived per chip generation).
    io_bytes = sum(int(a.size) * a.dtype.itemsize for a in args) + NH * Lout * 4
    temp_bytes = 14 * NH * max(Lin, Lout) * 4
    try:
        vmem_cap = int(pltpu.get_tpu_info().vmem_capacity_bytes)
    except Exception:
        vmem_cap = 64 << 20
    vmem_limit = int(min(vmem_cap * 3 // 4,
                         max(io_bytes + temp_bytes + (2 << 20), 16 << 20)))

    flops = 6 * NH * (Lin * Lout + Lout * Lout)   # 3 banded matmul taps per conv

    # TODO(synk): at production shapes (activations >> VMEM) switch to a row-band
    # grid over N*H with a 1-row halo and a two-pass BN (stats pass, then
    # normalize+conv pass) so HBM DMA pipelines and both v7x TensorCores are
    # used; at the small shapes here a single grid-less invocation is optimal.
    y = pl.pallas_call(
        functools.partial(up_block_kernel, N=N, H=H, W=W),
        out_shape=jax.ShapeDtypeStruct((NH, Lout), f32),
        in_specs=[pl.BlockSpec(memory_space=pltpu.MemorySpace.VMEM)] * len(args),
        out_specs=pl.BlockSpec(memory_space=pltpu.MemorySpace.VMEM),
        compiler_params=pltpu.CompilerParams(
            vmem_limit_bytes=vmem_limit,
            allow_input_fusion=[True] + [False] * (len(args) - 1)),
        cost_estimate=pl.CostEstimate(flops=int(flops),
                                      transcendentals=int(Lin + Lout),
                                      bytes_accessed=int(io_bytes)),
    )(*args)

    # PixelShuffle is already fused into the kernel's lane order: pure reshape.
    y = y.reshape(N, H * r, W * r, C2)
    return jnp.transpose(y, (0, 3, 1, 2))          # NHWC -> NCHW to match PyTorch


# ---------------- pure-JAX reference (for correctness check) ----------------
def up_block_reference(x_nchw, p, r):
    x = x_nchw.astype(jnp.float32)
    m = jnp.mean(x, axis=(0, 2, 3), keepdims=True)
    v = jnp.mean((x - m) ** 2, axis=(0, 2, 3), keepdims=True)
    y = (x - m) / jnp.sqrt(v + EPS)
    y = y * p["g1"].reshape(1, -1, 1, 1) + p["b1"].reshape(1, -1, 1, 1)

    w1 = jnp.transpose(p["w1"], (3, 2, 0, 1))  # (Cout, Cin, 3, 3), cross-correlation
    y = jax.lax.conv_general_dilated(y, w1, (1, 1), "SAME",
                                     dimension_numbers=("NCHW", "OIHW", "NCHW"))
    y = jnp.maximum(y + p["cb1"].reshape(1, -1, 1, 1), 0.0)

    w2 = jnp.transpose(p["w2"], (3, 2, 0, 1))
    y = jax.lax.conv_general_dilated(y, w2, (1, 1), "SAME",
                                     dimension_numbers=("NCHW", "OIHW", "NCHW"))
    y = jnp.maximum(y + p["cb2"].reshape(1, -1, 1, 1), 0.0)

    m2 = jnp.mean(y, axis=(0, 2, 3), keepdims=True)
    v2 = jnp.mean((y - m2) ** 2, axis=(0, 2, 3), keepdims=True)
    y = (y - m2) / jnp.sqrt(v2 + EPS)
    y = y * p["g2"].reshape(1, -1, 1, 1) + p["b2"].reshape(1, -1, 1, 1)
    y = jnp.maximum(y, 0.0)

    N, C, H, W = y.shape
    C2 = C // (r * r)
    y = y.reshape(N, C2, r, r, H, W)
    y = jnp.transpose(y, (0, 1, 4, 2, 5, 3)).reshape(N, C2, H * r, W * r)
    return y


def init_params(key, in_channels, out_channels):
    ks = jax.random.split(key, 8)
    s1 = 1.0 / np.sqrt(in_channels * 9)
    s2 = 1.0 / np.sqrt(out_channels * 9)
    return {
        # BatchNorm2d(in_channels): gamma=1, beta=0 (PyTorch defaults) + tiny jitter
        "g1": jnp.ones((1, in_channels), jnp.float32)
              + 0.1 * jax.random.normal(ks[0], (1, in_channels), jnp.float32),
        "b1": 0.1 * jax.random.normal(ks[1], (1, in_channels), jnp.float32),
        # Conv2d(in, out, 3, same): weight stored as (3, 3, Cin, Cout) (ky, kx taps)
        "w1": s1 * jax.random.normal(ks[2], (3, 3, in_channels, out_channels), jnp.float32),
        "cb1": s1 * jax.random.normal(ks[3], (1, out_channels), jnp.float32),
        # Conv2d(out, out, 3, same)
        "w2": s2 * jax.random.normal(ks[4], (3, 3, out_channels, out_channels), jnp.float32),
        "cb2": s2 * jax.random.normal(ks[5], (1, out_channels), jnp.float32),
        # BatchNorm2d(out_channels)
        "g2": jnp.ones((1, out_channels), jnp.float32)
              + 0.1 * jax.random.normal(ks[6], (1, out_channels), jnp.float32),
        "b2": 0.1 * jax.random.normal(ks[7], (1, out_channels), jnp.float32),
    }


if __name__ == "__main__":
    N, Cin, H, W = 2, 8, 16, 16
    Cout, r = 16, 2  # out_channels must be divisible by r^2 for PixelShuffle

    key = jax.random.PRNGKey(0)
    kx, kp = jax.random.split(key)
    x = jax.random.normal(kx, (N, Cin, H, W), jnp.float32)
    params = init_params(kp, Cin, Cout)

    # One-time weight/param preparation, hoisted out of the per-call path.
    prep = prepare_up_block_params(params, W=W, upscale_factor=r)

    fwd = jax.jit(functools.partial(up_block_forward, upscale_factor=r))
    out = jax.block_until_ready(fwd(x, prep))

    ref = jax.block_until_ready(up_block_reference(x, params, r))
    assert out.shape == (N, Cout // (r * r), H * r, W * r), out.shape
    # bf16 matmul operands (f32 accumulation) vs. pure-f32 reference: allow ~bf16-level error.
    np.testing.assert_allclose(np.asarray(out), np.asarray(ref), rtol=5e-2, atol=5e-2)

    print("KERNEL_OK")
</pallas_src>

<mosaic_0001>
module attributes {stable_mosaic.version = 11 : i64} {
  func.func @up_block_kernel(%arg0: memref<32x128xf32, #tpu.memory_space<vmem>>, %arg1: memref<32x1xf32, #tpu.memory_space<vmem>>, %arg2: memref<32x1xf32, #tpu.memory_space<vmem>>, %arg3: memref<1x128xf32, #tpu.memory_space<vmem>>, %arg4: memref<1x128xf32, #tpu.memory_space<vmem>>, %arg5: memref<128x128xf32, #tpu.memory_space<vmem>>, %arg6: memref<384x256xbf16, #tpu.memory_space<vmem>>, %arg7: memref<1x256xf32, #tpu.memory_space<vmem>>, %arg8: memref<3x256x256xbf16, #tpu.memory_space<vmem>>, %arg9: memref<1x256xf32, #tpu.memory_space<vmem>>, %arg10: memref<1x256xf32, #tpu.memory_space<vmem>>, %arg11: memref<1x256xf32, #tpu.memory_space<vmem>>, %arg12: memref<256x256xf32, #tpu.memory_space<vmem>>, %arg13: memref<32x256xf32, #tpu.memory_space<vmem>>) attributes {dimension_semantics = [], scalar_prefetch = 0 : i64, scratch_operands = 0 : i64, tpu.core_type = #tpu.core_type<tc>} {
    %c0 = arith.constant 0 : index
    %c0_0 = arith.constant 0 : index
    %0 = vector.load %arg1[%c0, %c0_0] : memref<32x1xf32, #tpu.memory_space<vmem>>, vector<32x1xf32>
    %c0_1 = arith.constant 0 : index
    %c0_2 = arith.constant 0 : index
    %1 = vector.load %arg2[%c0_1, %c0_2] : memref<32x1xf32, #tpu.memory_space<vmem>>, vector<32x1xf32>
    %c0_3 = arith.constant 0 : index
    %c0_4 = arith.constant 0 : index
    %2 = vector.load %arg0[%c0_3, %c0_4] : memref<32x128xf32, #tpu.memory_space<vmem>>, vector<32x128xf32>
    %cst = arith.constant dense<0.000000e+00> : vector<128xf32>
    %3 = vector.multi_reduction <add>, %2, %cst [0] : vector<32x128xf32> to vector<128xf32>
    %4 = vector.shape_cast %3 : vector<128xf32> to vector<1x128xf32>
    %5 = arith.mulf %2, %2 : vector<32x128xf32>
    %cst_5 = arith.constant dense<0.000000e+00> : vector<128xf32>
    %6 = vector.multi_reduction <add>, %5, %cst_5 [0] : vector<32x128xf32> to vector<128xf32>
    %7 = vector.shape_cast %6 : vector<128xf32> to vector<1x128xf32>
    %8 = tpu.concatenate %4, %7 in 0 : vector<1x128xf32>, vector<1x128xf32> -> vector<2x128xf32>
    %c0_6 = arith.constant 0 : index
    %c0_7 = arith.constant 0 : index
    %9 = vector.load %arg5[%c0_6, %c0_7] : memref<128x128xf32, #tpu.memory_space<vmem>>, vector<128x128xf32>
    %cst_8 = arith.constant dense<0.000000e+00> : vector<2x128xf32>
    %10 = tpu.matmul %8, %9, %cst_8 {dimension_numbers = #tpu.dot_dimension_numbers<[1], [0], [0], [1], [0, 0, 1, 1], [], []>} : vector<2x128xf32>, vector<128x128xf32>, vector<2x128xf32> -> vector<2x128xf32>
    %cst_9 = arith.constant 0.001953125 : f32
    %11 = vector.broadcast %cst_9 : f32 to vector<2x128xf32>
    %12 = arith.mulf %10, %11 : vector<2x128xf32>
    %13 = vector.extract_strided_slice %12 {offsets = [0, 0], sizes = [1, 128], strides = [1, 1]} : vector<2x128xf32> to vector<1x128xf32>
    %14 = vector.extract_strided_slice %12 {offsets = [1, 0], sizes = [1, 128], strides = [1, 1]} : vector<2x128xf32> to vector<1x128xf32>
    %15 = arith.mulf %13, %13 : vector<1x128xf32>
    %16 = arith.subf %14, %15 : vector<1x128xf32>
    %cst_10 = arith.constant 0.000000e+00 : f32
    %17 = vector.broadcast %cst_10 : f32 to vector<1x128xf32>
    %18 = arith.maximumf %16, %17 : vector<1x128xf32>
    %19 = vector.broadcast %13 : vector<1x128xf32> to vector<32x128xf32>
    %20 = arith.subf %2, %19 : vector<32x128xf32>
    %c0_11 = arith.constant 0 : index
    %c0_12 = arith.constant 0 : index
    %21 = vector.load %arg3[%c0_11, %c0_12] : memref<1x128xf32, #tpu.memory_space<vmem>>, vector<1x128xf32>
    %cst_13 = arith.constant 9.99999974E-6 : f32
    %22 = vector.broadcast %cst_13 : f32 to vector<1x128xf32>
    %23 = arith.addf %18, %22 : vector<1x128xf32>
    %24 = math.rsqrt %23 : vector<1x128xf32>
    %25 = arith.mulf %21, %24 : vector<1x128xf32>
    %26 = vector.broadcast %25 : vector<1x128xf32> to vector<32x128xf32>
    %27 = arith.mulf %20, %26 : vector<32x128xf32>
    %c0_14 = arith.constant 0 : index
    %c0_15 = arith.constant 0 : index
    %28 = vector.load %arg4[%c0_14, %c0_15] : memref<1x128xf32, #tpu.memory_space<vmem>>, vector<1x128xf32>
    %29 = vector.broadcast %28 : vector<1x128xf32> to vector<32x128xf32>
    %30 = arith.addf %27, %29 : vector<32x128xf32>
    %c1_i32 = arith.constant 1 : i32
    %31 = tpu.dynamic_rotate %30 by %c1_i32 dim 0 : vector<32x128xf32>, i32 -> vector<32x128xf32>
    %32 = vector.broadcast %0 : vector<32x1xf32> to vector<32x128xf32>
    %33 = arith.mulf %31, %32 : vector<32x128xf32>
    %c31_i32 = arith.constant 31 : i32
    %34 = tpu.dynamic_rotate %30 by %c31_i32 dim 0 : vector<32x128xf32>, i32 -> vector<32x128xf32>
    %35 = vector.broadcast %1 : vector<32x1xf32> to vector<32x128xf32>
    %36 = arith.mulf %34, %35 : vector<32x128xf32>
    %37 = arith.truncf %33 : vector<32x128xf32> to vector<32x128xbf16>
    %38 = arith.truncf %30 : vector<32x128xf32> to vector<32x128xbf16>
    %39 = arith.truncf %36 : vector<32x128xf32> to vector<32x128xbf16>
    %40 = tpu.concatenate %37, %38, %39 in 1 : vector<32x128xbf16>, vector<32x128xbf16>, vector<32x128xbf16> -> vector<32x384xbf16>
    %c0_16 = arith.constant 0 : index
    %c0_17 = arith.constant 0 : index
    %41 = vector.load %arg6[%c0_16, %c0_17] : memref<384x256xbf16, #tpu.memory_space<vmem>>, vector<384x256xbf16>
    %cst_18 = arith.constant dense<0.000000e+00> : vector<32x256xf32>
    %42 = tpu.matmul %40, %41, %cst_18 {dimension_numbers = #tpu.dot_dimension_numbers<[1], [0], [0], [1], [0, 0, 1, 1], [], []>} : vector<32x384xbf16>, vector<384x256xbf16>, vector<32x256xf32> -> vector<32x256xf32>
    %c0_19 = arith.constant 0 : index
    %c0_20 = arith.constant 0 : index
    %43 = vector.load %arg7[%c0_19, %c0_20] : memref<1x256xf32, #tpu.memory_space<vmem>>, vector<1x256xf32>
    %44 = vector.broadcast %43 : vector<1x256xf32> to vector<32x256xf32>
    %45 = arith.addf %42, %44 : vector<32x256xf32>
    %cst_21 = arith.constant 0.000000e+00 : f32
    %46 = vector.broadcast %cst_21 : f32 to vector<32x256xf32>
    %47 = arith.maximumf %45, %46 : vector<32x256xf32>
    %c1_i32_22 = arith.constant 1 : i32
    %48 = tpu.dynamic_rotate %47 by %c1_i32_22 dim 0 : vector<32x256xf32>, i32 -> vector<32x256xf32>
    %49 = vector.broadcast %0 : vector<32x1xf32> to vector<32x256xf32>
    %50 = arith.mulf %48, %49 : vector<32x256xf32>
    %c31_i32_23 = arith.constant 31 : i32
    %51 = tpu.dynamic_rotate %47 by %c31_i32_23 dim 0 : vector<32x256xf32>, i32 -> vector<32x256xf32>
    %52 = vector.broadcast %1 : vector<32x1xf32> to vector<32x256xf32>
    %53 = arith.mulf %51, %52 : vector<32x256xf32>
    %54 = arith.truncf %50 : vector<32x256xf32> to vector<32x256xbf16>
    %c0_24 = arith.constant 0 : index
    %c0_25 = arith.constant 0 : index
    %c0_26 = arith.constant 0 : index
    %55 = vector.load %arg8[%c0_24, %c0_25, %c0_26] : memref<3x256x256xbf16, #tpu.memory_space<vmem>>, vector<1x256x256xbf16>
    %56 = vector.shape_cast %55 : vector<1x256x256xbf16> to vector<256x256xbf16>
    %cst_27 = arith.constant dense<0.000000e+00> : vector<32x256xf32>
    %57 = tpu.matmul %54, %56, %cst_27 {dimension_numbers = #tpu.dot_dimension_numbers<[1], [0], [0], [1], [0, 0, 1, 1], [], []>} : vector<32x256xbf16>, vector<256x256xbf16>, vector<32x256xf32> -> vector<32x256xf32>
    %58 = arith.truncf %47 : vector<32x256xf32> to vector<32x256xbf16>
    %c1 = arith.constant 1 : index
    %c0_28 = arith.constant 0 : index
    %c0_29 = arith.constant 0 : index
    %59 = vector.load %arg8[%c1, %c0_28, %c0_29] : memref<3x256x256xbf16, #tpu.memory_space<vmem>>, vector<1x256x256xbf16>
    %60 = vector.shape_cast %59 : vector<1x256x256xbf16> to vector<256x256xbf16>
    %cst_30 = arith.constant dense<0.000000e+00> : vector<32x256xf32>
    %61 = tpu.matmul %58, %60, %cst_30 {dimension_numbers = #tpu.dot_dimension_numbers<[1], [0], [0], [1], [0, 0, 1, 1], [], []>} : vector<32x256xbf16>, vector<256x256xbf16>, vector<32x256xf32> -> vector<32x256xf32>
    %62 = arith.addf %57, %61 : vector<32x256xf32>
    %63 = arith.truncf %53 : vector<32x256xf32> to vector<32x256xbf16>
    %c2 = arith.constant 2 : index
    %c0_31 = arith.constant 0 : index
    %c0_32 = arith.constant 0 : index
    %64 = vector.load %arg8[%c2, %c0_31, %c0_32] : memref<3x256x256xbf16, #tpu.memory_space<vmem>>, vector<1x256x256xbf16>
    %65 = vector.shape_cast %64 : vector<1x256x256xbf16> to vector<256x256xbf16>
    %cst_33 = arith.constant dense<0.000000e+00> : vector<32x256xf32>
    %66 = tpu.matmul %63, %65, %cst_33 {dimension_numbers = #tpu.dot_dimension_numbers<[1], [0], [0], [1], [0, 0, 1, 1], [], []>} : vector<32x256xbf16>, vector<256x256xbf16>, vector<32x256xf32> -> vector<32x256xf32>
    %67 = arith.addf %62, %66 : vector<32x256xf32>
    %c0_34 = arith.constant 0 : index
    %c0_35 = arith.constant 0 : index
    %68 = vector.load %arg9[%c0_34, %c0_35] : memref<1x256xf32, #tpu.memory_space<vmem>>, vector<1x256xf32>
    %69 = vector.broadcast %68 : vector<1x256xf32> to vector<32x256xf32>
    %70 = arith.addf %67, %69 : vector<32x256xf32>
    %cst_36 = arith.constant 0.000000e+00 : f32
    %71 = vector.broadcast %cst_36 : f32 to vector<32x256xf32>
    %72 = arith.maximumf %70, %71 : vector<32x256xf32>
    %cst_37 = arith.constant dense<0.000000e+00> : vector<256xf32>
    %73 = vector.multi_reduction <add>, %72, %cst_37 [0] : vector<32x256xf32> to vector<256xf32>
    %74 = vector.shape_cast %73 : vector<256xf32> to vector<1x256xf32>
    %75 = arith.mulf %72, %72 : vector<32x256xf32>
    %cst_38 = arith.constant dense<0.000000e+00> : vector<256xf32>
    %76 = vector.multi_reduction <add>, %75, %cst_38 [0] : vector<32x256xf32> to vector<256xf32>
    %77 = vector.shape_cast %76 : vector<256xf32> to vector<1x256xf32>
    %78 = tpu.concatenate %74, %77 in 0 : vector<1x256xf32>, vector<1x256xf32> -> vector<2x256xf32>
    %c0_39 = arith.constant 0 : index
    %c0_40 = arith.constant 0 : index
    %79 = vector.load %arg12[%c0_39, %c0_40] : memref<256x256xf32, #tpu.memory_space<vmem>>, vector<256x256xf32>
    %cst_41 = arith.constant dense<0.000000e+00> : vector<2x256xf32>
    %80 = tpu.matmul %78, %79, %cst_41 {dimension_numbers = #tpu.dot_dimension_numbers<[1], [0], [0], [1], [0, 0, 1, 1], [], []>} : vector<2x256xf32>, vector<256x256xf32>, vector<2x256xf32> -> vector<2x256xf32>
    %cst_42 = arith.constant 0.001953125 : f32
    %81 = vector.broadcast %cst_42 : f32 to vector<2x256xf32>
    %82 = arith.mulf %80, %81 : vector<2x256xf32>
    %83 = vector.extract_strided_slice %82 {offsets = [0, 0], sizes = [1, 256], strides = [1, 1]} : vector<2x256xf32> to vector<1x256xf32>
    %84 = vector.extract_strided_slice %82 {offsets = [1, 0], sizes = [1, 256], strides = [1, 1]} : vector<2x256xf32> to vector<1x256xf32>
    %85 = arith.mulf %83, %83 : vector<1x256xf32>
    %86 = arith.subf %84, %85 : vector<1x256xf32>
    %cst_43 = arith.constant 0.000000e+00 : f32
    %87 = vector.broadcast %cst_43 : f32 to vector<1x256xf32>
    %88 = arith.maximumf %86, %87 : vector<1x256xf32>
    %89 = vector.broadcast %83 : vector<1x256xf32> to vector<32x256xf32>
    %90 = arith.subf %72, %89 : vector<32x256xf32>
    %c0_44 = arith.constant 0 : index
    %c0_45 = arith.constant 0 : index
    %91 = vector.load %arg10[%c0_44, %c0_45] : memref<1x256xf32, #tpu.memory_space<vmem>>, vector<1x256xf32>
    %cst_46 = arith.constant 9.99999974E-6 : f32
    %92 = vector.broadcast %cst_46 : f32 to vector<1x256xf32>
    %93 = arith.addf %88, %92 : vector<1x256xf32>
    %94 = math.rsqrt %93 : vector<1x256xf32>
    %95 = arith.mulf %91, %94 : vector<1x256xf32>
    %96 = vector.broadcast %95 : vector<1x256xf32> to vector<32x256xf32>
    %97 = arith.mulf %90, %96 : vector<32x256xf32>
    %c0_47 = arith.constant 0 : index
    %c0_48 = arith.constant 0 : index
    %98 = vector.load %arg11[%c0_47, %c0_48] : memref<1x256xf32, #tpu.memory_space<vmem>>, vector<1x256xf32>
    %99 = vector.broadcast %98 : vector<1x256xf32> to vector<32x256xf32>
    %100 = arith.addf %97, %99 : vector<32x256xf32>
    %cst_49 = arith.constant 0.000000e+00 : f32
    %101 = vector.broadcast %cst_49 : f32 to vector<32x256xf32>
    %102 = arith.maximumf %100, %101 : vector<32x256xf32>
    %c0_50 = arith.constant 0 : index
    %c0_51 = arith.constant 0 : index
    %103 = vector.load %arg13[%c0_50, %c0_51] : memref<32x256xf32, #tpu.memory_space<vmem>>, vector<32x256xf32>
    tpu.vector_store %arg13[%c0_50, %c0_51], %102 {strides = array<i32>} : memref<32x256xf32, #tpu.memory_space<vmem>>, vector<32x256xf32>,
    return
  }
}

</mosaic_0001>

<llo_original>
// kernel: up_block_forward.1
$region0: #{up_block_forward.1}
  #allocation0 [shape = 'u32[]', space=smem, size = 0x4, offset = 0x4, fixed_abs, tag = 'smem constant byte address 0x4 - core index']
  #allocation1 [shape = 'u32[144,128]{1,0:T(1,128)}', space=vmem, size = 0x12000, scoped, tag = 'internal scratch']
  %s0 = inlined_call_operand.vmem [shape: f32[32,128], index: 0, kind: input, shape index: {}]
  %s1 = inlined_call_operand.vmem [shape: f32[32,1], index: 1, kind: input, shape index: {}]
  %s2 = inlined_call_operand.vmem [shape: f32[32,1], index: 2, kind: input, shape index: {}]
  %s3 = inlined_call_operand.vmem [shape: f32[1,128], index: 3, kind: input, shape index: {}]
  %s4 = inlined_call_operand.vmem [shape: f32[1,128], index: 4, kind: input, shape index: {}]
  %s5 = inlined_call_operand.hbm [shape: f32[128,128], index: 5, kind: input, shape index: {}]
  %s6 = inlined_call_operand.vmem [shape: bf16[384,256], index: 6, kind: input, shape index: {}]
  %s7 = inlined_call_operand.vmem [shape: f32[1,256], index: 7, kind: input, shape index: {}]
  %s8 = inlined_call_operand.vmem [shape: bf16[3,256,256], index: 8, kind: input, shape index: {}]
  %s9 = inlined_call_operand.vmem [shape: f32[1,256], index: 9, kind: input, shape index: {}]
  %s10 = inlined_call_operand.vmem [shape: f32[1,256], index: 10, kind: input, shape index: {}]
  %s11 = inlined_call_operand.vmem [shape: f32[1,256], index: 11, kind: input, shape index: {}]
  %s12 = inlined_call_operand.hbm [shape: f32[256,256], index: 12, kind: input, shape index: {}]
  %s13 = inlined_call_operand.vmem [shape: f32[32,256], index: 13, kind: output, shape index: {}]
  %s14 = sld [smem:[#allocation0]]
  $region70: #{up_block_forward.1} parent=0
    _
  %s16 = ssub.s32 1, %s14
  %s17 = scalar_select 0, %s16, %s14
  $region1: #{up_block_forward.1} parent=0
    #allocation2 [shape = 'u8[65536]{0}', space=vmem, size = 0x10000, scoped, tag = 'input window, operand 5, single buffered']
    #allocation3 [shape = 's32[1]{0}', space=sflag, size = 0x4, scoped, tag = 'scoped memory for up_block_forward.1']
    #allocation4 [shape = 'u8[262144]{0}', space=vmem, size = 0x40000, scoped, tag = 'input window, operand 12, single buffered']
    #allocation5 [shape = 's32[1]{0}', space=sflag, size = 0x4, scoped, tag = 'scoped memory for up_block_forward.1']
    %18 = vsyncpa [#allocation3], 0
    %19 = vsyncpa [#allocation5], 0
    // Predicated region
    $region2: #{up_block_forward.1} parent=1 // pred_check
      _
    $region3: #{up_block_forward.1} parent=1 // pred_check_branch
      %21 = sbr.rel (0) target = $region5
    $region4: #{up_block_forward.1} parent=1 // pred_region
      _
    $region5: #{up_block_forward.1} parent=1 // pred_fallthru
      _
    // Predicated region
    $region6: #{up_block_forward.1} parent=1 // pred_check
      _
    $region7: #{up_block_forward.1} parent=1 // pred_check_branch
      %23 = sbr.rel (0) target = $region9
    $region8: #{up_block_forward.1} parent=1 // pred_region
      _
    $region9: #{up_block_forward.1} parent=1 // pred_fallthru
      _
    // Predicated region
    $region10: #{up_block_forward.1} parent=1 // pred_check
      _
    $region11: #{up_block_forward.1} parent=1 // pred_check_branch
      %25 = sbr.rel (0) target = $region13
    $region12: #{up_block_forward.1} parent=1 // pred_region
      _
    $region13: #{up_block_forward.1} parent=1 // pred_fallthru
      _
    // Predicated region
    $region14: #{up_block_forward.1} parent=1 // pred_check
      _
    $region15: #{up_block_forward.1} parent=1 // pred_check_branch
      %27 = sbr.rel (0) target = $region17
    $region16: #{up_block_forward.1} parent=1 // pred_region
      _
    $region17: #{up_block_forward.1} parent=1 // pred_fallthru
      _
    // Predicated region
    $region18: #{up_block_forward.1} parent=1 // pred_check
      _
    $region19: #{up_block_forward.1} parent=1 // pred_check_branch
      %29 = sbr.rel (0) target = $region21
    $region20: #{up_block_forward.1} parent=1 // pred_region
      _
    $region21: #{up_block_forward.1} parent=1 // pred_fallthru
      _
    // Predicated region
    $region22: #{up_block_forward.1} parent=1 // pred_check
      _
    $region23: #{up_block_forward.1} parent=1 // pred_check_branch
      %31 = sbr.rel (0) target = $region25
    $region24: #{up_block_forward.1} parent=1 // pred_region
      %s33 = ssub.s32 2048, 2048
      %34 = vsyncadd [#allocation3], %s33
      %s35 = sshll.u32 [#allocation2], 4
      %s36 = int_to_ptr.vmem [resolvable:$true] %s35
      %41 = dma.hbm_to_vmem [thread:$0]  %s5, 2048, %s36, [#allocation3], 128, 128, 8
    $region25: #{up_block_forward.1} parent=1 // pred_fallthru
      _
    // Predicated region
    $region26: #{up_block_forward.1} parent=1 // pred_check
      _
    $region27: #{up_block_forward.1} parent=1 // pred_check_branch
      %43 = sbr.rel (0) target = $region29
    $region28: #{up_block_forward.1} parent=1 // pred_region
      _
    $region29: #{up_block_forward.1} parent=1 // pred_fallthru
      _
    // Predicated region
    $region30: #{up_block_forward.1} parent=1 // pred_check
      _
    $region31: #{up_block_forward.1} parent=1 // pred_check_branch
      %45 = sbr.rel (0) target = $region33
    $region32: #{up_block_forward.1} parent=1 // pred_region
      _
    $region33: #{up_block_forward.1} parent=1 // pred_fallthru
      _
    // Predicated region
    $region34: #{up_block_forward.1} parent=1 // pred_check
      _
    $region35: #{up_block_forward.1} parent=1 // pred_check_branch
      %47 = sbr.rel (0) target = $region37
    $region36: #{up_block_forward.1} parent=1 // pred_region
      _
    $region37: #{up_block_forward.1} parent=1 // pred_fallthru
      _
    // Predicated region
    $region38: #{up_block_forward.1} parent=1 // pred_check
      _
    $region39: #{up_block_forward.1} parent=1 // pred_check_branch
      %49 = sbr.rel (0) target = $region41
    $region40: #{up_block_forward.1} parent=1 // pred_region
      _
    $region41: #{up_block_forward.1} parent=1 // pred_fallthru
      _
    // Predicated region
    $region42: #{up_block_forward.1} parent=1 // pred_check
      _
    $region43: #{up_block_forward.1} parent=1 // pred_check_branch
      %51 = sbr.rel (0) target = $region45
    $region44: #{up_block_forward.1} parent=1 // pred_region
      _
    $region45: #{up_block_forward.1} parent=1 // pred_fallthru
      _
    // Predicated region
    $region46: #{up_block_forward.1} parent=1 // pred_check
      _
    $region47: #{up_block_forward.1} parent=1 // pred_check_branch
      %53 = sbr.rel (0) target = $region49
    $region48: #{up_block_forward.1} parent=1 // pred_region
      _
    $region49: #{up_block_forward.1} parent=1 // pred_fallthru
      _
    // Predicated region
    $region50: #{up_block_forward.1} parent=1 // pred_check
      _
    $region51: #{up_block_forward.1} parent=1 // pred_check_branch
      %55 = sbr.rel (0) target = $region53
    $region52: #{up_block_forward.1} parent=1 // pred_region
      %s57 = ssub.s32 8192, 8192
      %58 = vsyncadd [#allocation5], %s57
      %s59 = sshll.u32 [#allocation4], 4
      %s60 = int_to_ptr.vmem [resolvable:$true] %s59
      %65 = dma.hbm_to_vmem [thread:$0]  %s12, 8192, %s60, [#allocation5], 256, 256, 16
    $region53: #{up_block_forward.1} parent=1 // pred_fallthru
      _
    // Predicated region
    $region54: #{up_block_forward.1} parent=1 // pred_check
      _
    $region55: #{up_block_forward.1} parent=1 // pred_check_branch
      %67 = sbr.rel (0) target = $region57
    $region56: #{up_block_forward.1} parent=1 // pred_region
      %68 = dma.done [#allocation3], 2048
    $region57: #{up_block_forward.1} parent=1 // pred_fallthru
      _
    // Predicated region
    $region58: #{up_block_forward.1} parent=1 // pred_check
      _
    $region59: #{up_block_forward.1} parent=1 // pred_check_branch
      %70 = sbr.rel (0) target = $region61
    $region60: #{up_block_forward.1} parent=1 // pred_region
      %71 = dma.done [#allocation5], 8192
    $region61: #{up_block_forward.1} parent=1 // pred_fallthru
      _
    %v73 = vld [vmem:[%s1] sm:$0xff]
    %v74 = vld [vmem:[%s1 + $0x8] sm:$0xff]
    %v75 = vld [vmem:[%s1 + $0x10] sm:$0xff]
    %v76 = vld [vmem:[%s1 + $0x18] sm:$0xff]
    %v77 = vld [vmem:[%s2] sm:$0xff]
    %v78 = vld [vmem:[%s2 + $0x8] sm:$0xff]
    %v79 = vld [vmem:[%s2 + $0x10] sm:$0xff]
    %v80 = vld [vmem:[%s2 + $0x18] sm:$0xff]
    %v81 = vld [vmem:[%s0] sm:$0xff]
    %v82 = vld [vmem:[%s0 + $0x8] sm:$0xff]
    %v83 = vld [vmem:[%s0 + $0x10] sm:$0xff]
    %v84 = vld [vmem:[%s0 + $0x18] sm:$0xff]
    %v85 = vadd.f32 %v81, %v82
    %v86 = vadd.f32 %v85, %v83
    %v87 = vadd.f32 %v86, %v84
    %v88 = vrot.slane %v87, 4
    %v89 = vadd.f32 %v87, %v88
    %v90 = vrot.slane %v89, 2
    %v91 = vadd.f32 %v89, %v90
    %v92 = vrot.slane %v91, 1
    %v93 = vadd.f32 %v91, %v92
    %v94 = vmul.f32 %v81, %v81
    %v95 = vmul.f32 %v82, %v82
    %v96 = vmul.f32 %v83, %v83
    %v97 = vmul.f32 %v84, %v84
    %v98 = vadd.f32 %v94, %v95
    %v99 = vadd.f32 %v98, %v96
    %v100 = vadd.f32 %v99, %v97
    %v101 = vrot.slane %v100, 4
    %v102 = vadd.f32 %v100, %v101
    %v103 = vrot.slane %v102, 2
    %v104 = vadd.f32 %v102, %v103
    %v105 = vrot.slane %v104, 1
    %v106 = vadd.f32 %v104, %v105
    %vm107 = vcmask 1040384
    %v108 = vsel %vm107, %v93, %v106
    %v109 = vld [vmem:[#allocation2] sm:$0xff]
    %v110 = vld [vmem:[#allocation2 + $0x8] sm:$0xff]
    %v111 = vld [vmem:[#allocation2 + $0x10] sm:$0xff]
    %v112 = vld [vmem:[#allocation2 + $0x18] sm:$0xff]
    %v113 = vld [vmem:[#allocation2 + $0x20] sm:$0xff]
    %v114 = vld [vmem:[#allocation2 + $0x28] sm:$0xff]
    %v115 = vld [vmem:[#allocation2 + $0x30] sm:$0xff]
    %v116 = vld [vmem:[#allocation2 + $0x38] sm:$0xff]
    %v117 = vld [vmem:[#allocation2 + $0x40] sm:$0xff]
    %v118 = vld [vmem:[#allocation2 + $0x48] sm:$0xff]
    %v119 = vld [vmem:[#allocation2 + $0x50] sm:$0xff]
    %v120 = vld [vmem:[#allocation2 + $0x58] sm:$0xff]
    %v121 = vld [vmem:[#allocation2 + $0x60] sm:$0xff]
    %v122 = vld [vmem:[#allocation2 + $0x68] sm:$0xff]
    %v123 = vld [vmem:[#allocation2 + $0x70] sm:$0xff]
    %v124 = vld [vmem:[#allocation2 + $0x78] sm:$0xff]
    %125 = vmatprep.subr.mxu0 0.0
    %126 = vmatpush1.msra.mxu0 %v109
    %127 = vmatprep.subr.mxu0 0.0
    %128 = vmatpush1.msra.mxu0 %v110
    %129 = vmatprep.subr.mxu0 0.0
    %130 = vmatpush1.msra.mxu0 %v111
    %131 = vmatprep.subr.mxu0 0.0
    %132 = vmatpush1.msra.mxu0 %v112
    %133 = vmatprep.subr.mxu0 0.0
    %134 = vmatpush1.msra.mxu0 %v113
    %135 = vmatprep.subr.mxu0 0.0
    %136 = vmatpush1.msra.mxu0 %v114
    %137 = vmatprep.subr.mxu0 0.0
    %138 = vmatpush1.msra.mxu0 %v115
    %139 = vmatprep.subr.mxu0 0.0
    %140 = vmatpush1.msra.mxu0 %v116
    %141 = vmatprep.subr.mxu0 0.0
    %142 = vmatpush1.msra.mxu0 %v117
    %143 = vmatprep.subr.mxu0 0.0
    %144 = vmatpush1.msra.mxu0 %v118
    %145 = vmatprep.subr.mxu0 0.0
    %146 = vmatpush1.msra.mxu0 %v119
    %147 = vmatprep.subr.mxu0 0.0
    %148 = vmatpush1.msra.mxu0 %v120
    %149 = vmatprep.subr.mxu0 0.0
    %150 = vmatpush1.msra.mxu0 %v121
    %151 = vmatprep.subr.mxu0 0.0
    %152 = vmatpush1.msra.mxu0 %v122
    %153 = vmatprep.subr.mxu0 0.0
    %154 = vmatpush1.msra.mxu0 %v123
    %155 = vmatprep.subr.mxu0 0.0
    %156 = vmatpush1.msra.mxu0 %v124
    %157 = vmatprep.subr.mxu0 0.0
    %158 = vmatpush1.msra.mxu0 0.0
    %159 = vmatprep.subr.mxu0 0.0
    %160 = vmatpush1.msra.mxu0 0.0
    %161 = vmatprep.subr.mxu0 0.0
    %162 = vmatpush1.msra.mxu0 0.0
    %163 = vmatprep.subr.mxu0 0.0
    %164 = vmatpush1.msra.mxu0 0.0
    %165 = vmatprep.subr.mxu0 0.0
    %166 = vmatpush1.msra.mxu0 0.0
    %167 = vmatprep.subr.mxu0 0.0
    %168 = vmatpush1.msra.mxu0 0.0
    %169 = vmatprep.subr.mxu0 0.0
    %170 = vmatpush1.msra.mxu0 0.0
    %171 = vmatprep.subr.mxu0 0.0
    %172 = vmatpush1.msra.mxu0 0.0
    %173 = vmatprep.subr.mxu0 0.0
    %174 = vmatpush1.msra.mxu0 0.0
    %175 = vmatprep.subr.mxu0 0.0
    %176 = vmatpush1.msra.mxu0 0.0
    %177 = vmatprep.subr.mxu0 0.0
    %178 = vmatpush1.msra.mxu0 0.0
    %179 = vmatprep.subr.mxu0 0.0
    %180 = vmatpush1.msra.mxu0 0.0
    %181 = vmatprep.subr.mxu0 0.0
    %182 = vmatpush1.msra.mxu0 0.0
    %183 = vmatprep.subr.mxu0 0.0
    %184 = vmatpush1.msra.mxu0 0.0
    %185 = vmatprep.subr.mxu0 0.0
    %186 = vmatpush1.msra.mxu0 0.0
    %187 = vmatprep.subr.mxu0 0.0
    %188 = vmatpush1.msra.mxu0 0.0
    %189 = vmatprep.mubr.f32.mxu0 0.0
    %190 = vmatmul.mubr.f32.gmra.mrb[0].mxu0 %v108
    %v191 = vpop.f32.mrb[0].mxu0
    %v192 = vadd.f32 0.0, %v191
    %v193 = vpop.f32.mrb[0].mxu0
    %194 = vdwg.mxu0
    %v195 = vmul.f32 %v192, 0.001953125
    %v196 = vmul.f32 %v195, %v195
    %v198 = vrot.slane %v196, 7
    %v200 = vsub.f32 %v195, %v198
    %v201 = vmax.f32 %v200, 0.0
    %v202 = vlaneseq
    %v203 = vshrl.u32 %v202, 7
    %v204 = vsub.s32 0, %v203
    %v205 = vrot.slane %v195, %v204
    %v206 = vsub.f32 %v81, %v205
    %v207 = vsub.f32 %v82, %v205
    %v208 = vsub.f32 %v83, %v205
    %v209 = vsub.f32 %v84, %v205
    %v210 = vld [vmem:[%s3] sm:$0x1]
    %v211 = vadd.f32 %v201, 1e-05
    %v212 = vrsqrt.pop %v211
    %v215 = vunpack.c.l.s4 1966171168
    %v216 = vunpack.c.0.s8 %v215
    %v217 = vlaneseq
    %v218 = vshrl.u32 %v217, 7
    %v219 = vsub.s32 %v216, %v218
    %v220 = vrot.slane %v212, %v219
    %v221 = vcombine.high %v220, %v220
    %v223 = vunpack.c.l.s4 1966171168
    %v224 = vunpack.c.0.s8 %v223
    %v225 = vlaneseq
    %v226 = vshrl.u32 %v225, 7
    %v227 = vsub.s32 %v224, %v226
    %v228 = vrot.slane %v221, %v227
    %v230 = vmul.f32 %v210, %v228
    %v232 = vlaneseq
    %v233 = vshrl.u32 %v232, 7
    %v234 = vsub.s32 0, %v233
    %v235 = vrot.slane %v230, %v234
    %v237 = vmul.f32 %v206, %v235
    %v238 = vmul.f32 %v207, %v235
    %v239 = vmul.f32 %v208, %v235
    %v240 = vmul.f32 %v209, %v235
    %v241 = vld [vmem:[%s4] sm:$0x1]
    %v243 = vlaneseq
    %v244 = vshrl.u32 %v243, 7
    %v245 = vsub.s32 0, %v244
    %v246 = vrot.slane %v241, %v245
    %v248 = vadd.f32 %v237, %v246
    %v249 = vadd.f32 %v238, %v246
    %v250 = vadd.f32 %v239, %v246
    %v251 = vadd.f32 %v240, %v246
    %v252 = vrot.slane %v248, 7
    %v253 = vrot.slane %v249, 7
    %v254 = vrot.slane %v250, 7
    %v255 = vrot.slane %v251, 7
    %v256 = vlaneseq
    %v257 = vshrl.u32 %v256, 7
    %vm258 = vcmp.lt.s32.totalorder %v257, 1
    %v259 = vsel %vm258, %v254, %v255
    %v260 = vsel %vm258, %v253, %v254
    %v261 = vsel %vm258, %v252, %v253
    %v262 = vsel %vm258, %v255, %v252
    %264 = vset.pattern.permute.xlu0 0
    %265 = vperm.xlu0 %264, %v73
    %v266 = vpop.permute.xlu0 %265
    %269 = vset.pattern.permute.xlu0 0
    %270 = vperm.xlu0 %269, %v74
    %v271 = vpop.permute.xlu0 %270
    %274 = vset.pattern.permute.xlu0 0
    %275 = vperm.xlu0 %274, %v75
    %v276 = vpop.permute.xlu0 %275
    %279 = vset.pattern.permute.xlu0 0
    %280 = vperm.xlu0 %279, %v76
    %v281 = vpop.permute.xlu0 %280
    %v283 = vmul.f32 %v262, %v266
    %v284 = vmul.f32 %v261, %v271
    %v285 = vmul.f32 %v260, %v276
    %v286 = vmul.f32 %v259, %v281
    %v287 = vrot.slane %v248, 1
    %v288 = vrot.slane %v249, 1
    %v289 = vrot.slane %v250, 1
    %v290 = vrot.slane %v251, 1
    %vm291 = vcmp.lt.s32.totalorder %v257, 7
    %v292 = vsel %vm291, %v289, %v290
    %v293 = vsel %vm291, %v288, %v289
    %v294 = vsel %vm291, %v287, %v288
    %v295 = vsel %vm291, %v290, %v287
    %297 = vset.pattern.permute.xlu0 0
    %298 = vperm.xlu0 %297, %v77
    %v299 = vpop.permute.xlu0 %298
    %302 = vset.pattern.permute.xlu0 0
    %303 = vperm.xlu0 %302, %v78
    %v304 = vpop.permute.xlu0 %303
    %307 = vset.pattern.permute.xlu0 0
    %308 = vperm.xlu0 %307, %v79
    %v309 = vpop.permute.xlu0 %308
    %312 = vset.pattern.permute.xlu0 0
    %313 = vperm.xlu0 %312, %v80
    %v314 = vpop.permute.xlu0 %313
    %v316 = vmul.f32 %v294, %v299
    %v317 = vmul.f32 %v293, %v304
    %v318 = vmul.f32 %v292, %v309
    %v319 = vmul.f32 %v295, %v314
    %v320 = vpack.c.bf16 %v284, %v283
    %v321 = vpack.c.bf16 %v286, %v285
    %v322 = vpack.c.bf16 %v249, %v248
    %v323 = vpack.c.bf16 %v251, %v250
    %v324 = vpack.c.bf16 %v317, %v316
    %v325 = vpack.c.bf16 %v319, %v318
    %v326 = vld [vmem:[%s6] sm:$0xff]
    %v327 = vld [vmem:[%s6 + $0x8] sm:$0xff]
    %v328 = vld [vmem:[%s6 + $0x10] sm:$0xff]
    %v329 = vld [vmem:[%s6 + $0x18] sm:$0xff]
    %v330 = vld [vmem:[%s6 + $0x20] sm:$0xff]
    %v331 = vld [vmem:[%s6 + $0x28] sm:$0xff]
    %v332 = vld [vmem:[%s6 + $0x30] sm:$0xff]
    %v333 = vld [vmem:[%s6 + $0x38] sm:$0xff]
    %v334 = vld [vmem:[%s6 + $0x40] sm:$0xff]
    %v335 = vld [vmem:[%s6 + $0x48] sm:$0xff]
    %v336 = vld [vmem:[%s6 + $0x50] sm:$0xff]
    %v337 = vld [vmem:[%s6 + $0x58] sm:$0xff]
    %v338 = vld [vmem:[%s6 + $0x60] sm:$0xff]
    %v339 = vld [vmem:[%s6 + $0x68] sm:$0xff]
    %v340 = vld [vmem:[%s6 + $0x70] sm:$0xff]
    %v341 = vld [vmem:[%s6 + $0x78] sm:$0xff]
    %v342 = vld [vmem:[%s6 + $0x80] sm:$0xff]
    %v343 = vld [vmem:[%s6 + $0x88] sm:$0xff]
    %v344 = vld [vmem:[%s6 + $0x90] sm:$0xff]
    %v345 = vld [vmem:[%s6 + $0x98] sm:$0xff]
    %v346 = vld [vmem:[%s6 + $0xa0] sm:$0xff]
    %v347 = vld [vmem:[%s6 + $0xa8] sm:$0xff]
    %v348 = vld [vmem:[%s6 + $0xb0] sm:$0xff]
    %v349 = vld [vmem:[%s6 + $0xb8] sm:$0xff]
    %v350 = vld [vmem:[%s6 + $0xc0] sm:$0xff]
    %v351 = vld [vmem:[%s6 + $0xc8] sm:$0xff]
    %v352 = vld [vmem:[%s6 + $0xd0] sm:$0xff]
    %v353 = vld [vmem:[%s6 + $0xd8] sm:$0xff]
    %v354 = vld [vmem:[%s6 + $0xe0] sm:$0xff]
    %v355 = vld [vmem:[%s6 + $0xe8] sm:$0xff]
    %v356 = vld [vmem:[%s6 + $0xf0] sm:$0xff]
    %v357 = vld [vmem:[%s6 + $0xf8] sm:$0xff]
    %v358 = vld [vmem:[%s6 + $0x100] sm:$0xff]
    %v359 = vld [vmem:[%s6 + $0x108] sm:$0xff]
    %v360 = vld [vmem:[%s6 + $0x110] sm:$0xff]
    %v361 = vld [vmem:[%s6 + $0x118] sm:$0xff]
    %v362 = vld [vmem:[%s6 + $0x120] sm:$0xff]
    %v363 = vld [vmem:[%s6 + $0x128] sm:$0xff]
    %v364 = vld [vmem:[%s6 + $0x130] sm:$0xff]
    %v365 = vld [vmem:[%s6 + $0x138] sm:$0xff]
    %v366 = vld [vmem:[%s6 + $0x140] sm:$0xff]
    %v367 = vld [vmem:[%s6 + $0x148] sm:$0xff]
    %v368 = vld [vmem:[%s6 + $0x150] sm:$0xff]
    %v369 = vld [vmem:[%s6 + $0x158] sm:$0xff]
    %v370 = vld [vmem:[%s6 + $0x160] sm:$0xff]
    %v371 = vld [vmem:[%s6 + $0x168] sm:$0xff]
    %v372 = vld [vmem:[%s6 + $0x170] sm:$0xff]
    %v373 = vld [vmem:[%s6 + $0x178] sm:$0xff]
    %v374 = vld [vmem:[%s7] sm:$0x3]
    %v376 = vlaneseq
    %v377 = vshrl.u32 %v376, 7
    %v378 = vsub.s32 0, %v377
    %v379 = vrot.slane %v374, %v378
    %v380 = vlaneseq
    %v381 = vshrl.u32 %v380, 7
    %v382 = vsub.s32 1, %v381
    %v383 = vrot.slane %v374, %v382
    %v434 = vunpack.c.l.b16 %v326
    %v435 = vunpack.c.h.b16 %v326
    %v436 = vunpack.c.l.b16 %v327
    %v437 = vunpack.c.h.b16 %v327
    %v438 = vunpack.c.l.b16 %v328
    %v439 = vunpack.c.h.b16 %v328
    %v440 = vunpack.c.l.b16 %v329
    %v441 = vunpack.c.h.b16 %v329
    %v442 = vunpack.c.l.b16 %v330
    %v443 = vunpack.c.h.b16 %v330
    %v444 = vunpack.c.l.b16 %v331
    %v445 = vunpack.c.h.b16 %v331
    %v446 = vunpack.c.l.b16 %v332
    %v447 = vunpack.c.h.b16 %v332
    %v448 = vunpack.c.l.b16 %v333
    %v449 = vunpack.c.h.b16 %v333
    %v450 = vunpack.c.l.b16 %v334
    %v451 = vunpack.c.h.b16 %v334
    %v452 = vunpack.c.l.b16 %v335
    %v453 = vunpack.c.h.b16 %v335
    %v454 = vunpack.c.l.b16 %v336
    %v455 = vunpack.c.h.b16 %v336
    %v456 = vunpack.c.l.b16 %v337
    %v457 = vunpack.c.h.b16 %v337
    %v458 = vunpack.c.l.b16 %v338
    %v459 = vunpack.c.h.b16 %v338
    %v460 = vunpack.c.l.b16 %v339
    %v461 = vunpack.c.h.b16 %v339
    %v462 = vunpack.c.l.b16 %v340
    %v463 = vunpack.c.h.b16 %v340
    %v464 = vunpack.c.l.b16 %v341
    %v465 = vunpack.c.h.b16 %v341
    %v466 = vunpack.c.l.b16 %v342
    %v467 = vunpack.c.h.b16 %v342
    %v468 = vunpack.c.l.b16 %v343
    %v469 = vunpack.c.h.b16 %v343
    %v470 = vunpack.c.l.b16 %v344
    %v471 = vunpack.c.h.b16 %v344
    %v472 = vunpack.c.l.b16 %v345
    %v473 = vunpack.c.h.b16 %v345
    %v474 = vunpack.c.l.b16 %v346
    %v475 = vunpack.c.h.b16 %v346
    %v476 = vunpack.c.l.b16 %v347
    %v477 = vunpack.c.h.b16 %v347
    %v478 = vunpack.c.l.b16 %v348
    %v479 = vunpack.c.h.b16 %v348
    %v480 = vunpack.c.l.b16 %v349
    %v481 = vunpack.c.h.b16 %v349
    %v482 = vunpack.c.l.b16 %v350
    %v483 = vunpack.c.h.b16 %v350
    %v484 = vunpack.c.l.b16 %v351
    %v485 = vunpack.c.h.b16 %v351
    %v486 = vunpack.c.l.b16 %v352
    %v487 = vunpack.c.h.b16 %v352
    %v488 = vunpack.c.l.b16 %v353
    %v489 = vunpack.c.h.b16 %v353
    %v490 = vunpack.c.l.b16 %v354
    %v491 = vunpack.c.h.b16 %v354
    %v492 = vunpack.c.l.b16 %v355
    %v493 = vunpack.c.h.b16 %v355
    %v494 = vunpack.c.l.b16 %v356
    %v495 = vunpack.c.h.b16 %v356
    %v496 = vunpack.c.l.b16 %v357
    %v497 = vunpack.c.h.b16 %v357
    %v498 = vunpack.c.l.b16 %v358
    %v499 = vunpack.c.h.b16 %v358
    %v500 = vunpack.c.l.b16 %v359
    %v501 = vunpack.c.h.b16 %v359
    %v502 = vunpack.c.l.b16 %v360
    %v503 = vunpack.c.h.b16 %v360
    %v504 = vunpack.c.l.b16 %v361
    %v505 = vunpack.c.h.b16 %v361
    %v506 = vunpack.c.l.b16 %v362
    %v507 = vunpack.c.h.b16 %v362
    %v508 = vunpack.c.l.b16 %v363
    %v509 = vunpack.c.h.b16 %v363
    %v510 = vunpack.c.l.b16 %v364
    %v511 = vunpack.c.h.b16 %v364
    %v512 = vunpack.c.l.b16 %v365
    %v513 = vunpack.c.h.b16 %v365
    %v514 = vunpack.c.l.b16 %v366
    %v515 = vunpack.c.h.b16 %v366
    %v516 = vunpack.c.l.b16 %v367
    %v517 = vunpack.c.h.b16 %v367
    %v518 = vunpack.c.l.b16 %v368
    %v519 = vunpack.c.h.b16 %v368
    %v520 = vunpack.c.l.b16 %v369
    %v521 = vunpack.c.h.b16 %v369
    %v522 = vunpack.c.l.b16 %v370
    %v523 = vunpack.c.h.b16 %v370
    %v524 = vunpack.c.l.b16 %v371
    %v525 = vunpack.c.h.b16 %v371
    %v526 = vunpack.c.l.b16 %v372
    %v527 = vunpack.c.h.b16 %v372
    %v528 = vunpack.c.l.b16 %v373
    %v529 = vunpack.c.h.b16 %v373
    %v530 = vpack.c.b16 %v436, %v434
    %v531 = vpack.c.b16 %v437, %v435
    %v532 = vpack.c.b16 %v440, %v438
    %v533 = vpack.c.b16 %v441, %v439
    %v534 = vpack.c.b16 %v444, %v442
    %v535 = vpack.c.b16 %v445, %v443
    %v536 = vpack.c.b16 %v448, %v446
    %v537 = vpack.c.b16 %v449, %v447
    %v538 = vpack.c.b16 %v452, %v450
    %v539 = vpack.c.b16 %v453, %v451
    %v540 = vpack.c.b16 %v456, %v454
    %v541 = vpack.c.b16 %v457, %v455
    %v542 = vpack.c.b16 %v460, %v458
    %v543 = vpack.c.b16 %v461, %v459
    %v544 = vpack.c.b16 %v464, %v462
    %v545 = vpack.c.b16 %v465, %v463
    %v546 = vpack.c.b16 %v468, %v466
    %v547 = vpack.c.b16 %v469, %v467
    %v548 = vpack.c.b16 %v472, %v470
    %v549 = vpack.c.b16 %v473, %v471
    %v550 = vpack.c.b16 %v476, %v474
    %v551 = vpack.c.b16 %v477, %v475
    %v552 = vpack.c.b16 %v480, %v478
    %v553 = vpack.c.b16 %v481, %v479
    %v554 = vpack.c.b16 %v484, %v482
    %v555 = vpack.c.b16 %v485, %v483
    %v556 = vpack.c.b16 %v488, %v486
    %v557 = vpack.c.b16 %v489, %v487
    %v558 = vpack.c.b16 %v492, %v490
    %v559 = vpack.c.b16 %v493, %v491
    %v560 = vpack.c.b16 %v496, %v494
    %v561 = vpack.c.b16 %v497, %v495
    %v562 = vpack.c.b16 %v500, %v498
    %v563 = vpack.c.b16 %v501, %v499
    %v564 = vpack.c.b16 %v504, %v502
    %v565 = vpack.c.b16 %v505, %v503
    %v566 = vpack.c.b16 %v508, %v506
    %v567 = vpack.c.b16 %v509, %v507
    %v568 = vpack.c.b16 %v512, %v510
    %v569 = vpack.c.b16 %v513, %v511
    %v570 = vpack.c.b16 %v516, %v514
    %v571 = vpack.c.b16 %v517, %v515
    %v572 = vpack.c.b16 %v520, %v518
    %v573 = vpack.c.b16 %v521, %v519
    %v574 = vpack.c.b16 %v524, %v522
    %v575 = vpack.c.b16 %v525, %v523
    %v576 = vpack.c.b16 %v528, %v526
    %v577 = vpack.c.b16 %v529, %v527
    %626 = vmatprep.subr.bf16.mxu0 %v531
    %627 = vmatpush1.bf16.msra.mxu0 %v530
    %628 = vmatprep.subr.bf16.mxu0 %v533
    %629 = vmatpush1.bf16.msra.mxu0 %v532
    %630 = vmatprep.subr.bf16.mxu0 %v535
    %631 = vmatpush1.bf16.msra.mxu0 %v534
    %632 = vmatprep.subr.bf16.mxu0 %v537
    %633 = vmatpush1.bf16.msra.mxu0 %v536
    %634 = vmatprep.subr.bf16.mxu0 %v539
    %635 = vmatpush1.bf16.msra.mxu0 %v538
    %636 = vmatprep.subr.bf16.mxu0 %v541
    %637 = vmatpush1.bf16.msra.mxu0 %v540
    %638 = vmatprep.subr.bf16.mxu0 %v543
    %639 = vmatpush1.bf16.msra.mxu0 %v542
    %640 = vmatprep.subr.bf16.mxu0 %v545
    %641 = vmatpush1.bf16.msra.mxu0 %v544
    %642 = vmatprep.subr.bf16.mxu0 %v547
    %643 = vmatpush1.bf16.msra.mxu0 %v546
    %644 = vmatprep.subr.bf16.mxu0 %v549
    %645 = vmatpush1.bf16.msra.mxu0 %v548
    %646 = vmatprep.subr.bf16.mxu0 %v551
    %647 = vmatpush1.bf16.msra.mxu0 %v550
    %648 = vmatprep.subr.bf16.mxu0 %v553
    %649 = vmatpush1.bf16.msra.mxu0 %v552
    %650 = vmatprep.subr.bf16.mxu0 %v555
    %651 = vmatpush1.bf16.msra.mxu0 %v554
    %652 = vmatprep.subr.bf16.mxu0 %v557
    %653 = vmatpush1.bf16.msra.mxu0 %v556
    %654 = vmatprep.subr.bf16.mxu0 %v559
    %655 = vmatpush1.bf16.msra.mxu0 %v558
    %656 = vmatprep.subr.bf16.mxu0 %v561
    %657 = vmatpush1.bf16.msra.mxu0 %v560
    %658 = vmatprep.mubr.bf16.mxu0 %v322
    %659 = vmatmul.mubr.bf16.gmra.mrb[0].mxu0 %v320
    %v660 = vpop.f32.mrb[0].mxu0
    %v661 = vadd.f32 %v379, %v660
    %v662 = vpop.f32.mrb[0].mxu0
    %v663 = vadd.f32 %v383, %v662
    %v664 = vpop.f32.mrb[0].mxu0
    %v665 = vadd.f32 %v379, %v664
    %v666 = vpop.f32.mrb[0].mxu0
    %v667 = vadd.f32 %v383, %v666
    %668 = vmatprep.mubr.bf16.mxu0 %v323
    %669 = vmatmul.mubr.bf16.gmra.mrb[0].mxu0 %v321
    %v670 = vpop.f32.mrb[0].mxu0
    %v671 = vadd.f32 %v379, %v670
    %v672 = vpop.f32.mrb[0].mxu0
    %v673 = vadd.f32 %v383, %v672
    %v674 = vpop.f32.mrb[0].mxu0
    %v675 = vadd.f32 %v379, %v674
    %v676 = vpop.f32.mrb[0].mxu0
    %v677 = vadd.f32 %v383, %v676
    %678 = vdwg.mxu0
    %679 = vmatprep.subr.bf16.mxu0 %v563
    %680 = vmatpush1.bf16.msra.mxu0 %v562
    %681 = vmatprep.subr.bf16.mxu0 %v565
    %682 = vmatpush1.bf16.msra.mxu0 %v564
    %683 = vmatprep.subr.bf16.mxu0 %v567
    %684 = vmatpush1.bf16.msra.mxu0 %v566
    %685 = vmatprep.subr.bf16.mxu0 %v569
    %686 = vmatpush1.bf16.msra.mxu0 %v568
    %687 = vmatprep.subr.bf16.mxu0 %v571
    %688 = vmatpush1.bf16.msra.mxu0 %v570
    %689 = vmatprep.subr.bf16.mxu0 %v573
    %690 = vmatpush1.bf16.msra.mxu0 %v572
    %691 = vmatprep.subr.bf16.mxu0 %v575
    %692 = vmatpush1.bf16.msra.mxu0 %v574
    %693 = vmatprep.subr.bf16.mxu0 %v577
    %694 = vmatpush1.bf16.msra.mxu0 %v576
    %695 = vmatprep.subr.bf16.mxu0 0
    %696 = vmatpush1.bf16.msra.mxu0 0
    %697 = vmatprep.subr.bf16.mxu0 0
    %698 = vmatpush1.bf16.msra.mxu0 0
    %699 = vmatprep.subr.bf16.mxu0 0
    %700 = vmatpush1.bf16.msra.mxu0 0
    %701 = vmatprep.subr.bf16.mxu0 0
    %702 = vmatpush1.bf16.msra.mxu0 0
    %703 = vmatprep.subr.bf16.mxu0 0
    %704 = vmatpush1.bf16.msra.mxu0 0
    %705 = vmatprep.subr.bf16.mxu0 0
    %706 = vmatpush1.bf16.msra.mxu0 0
    %707 = vmatprep.subr.bf16.mxu0 0
    %708 = vmatpush1.bf16.msra.mxu0 0
    %709 = vmatprep.subr.bf16.mxu0 0
    %710 = vmatpush1.bf16.msra.mxu0 0
    %711 = vmatprep.mubr.bf16.mxu0 0
    %712 = vmatmul.mubr.bf16.gmra.mrb[0].mxu0 %v324
    %v713 = vpop.f32.mrb[0].mxu0
    %v714 = vadd.f32 %v661, %v713
    %v715 = vpop.f32.mrb[0].mxu0
    %v716 = vadd.f32 %v663, %v715
    %v717 = vpop.f32.mrb[0].mxu0
    %v718 = vadd.f32 %v665, %v717
    %v719 = vpop.f32.mrb[0].mxu0
    %v720 = vadd.f32 %v667, %v719
    %721 = vmatprep.mubr.bf16.mxu0 0
    %722 = vmatmul.mubr.bf16.gmra.mrb[0].mxu0 %v325
    %v723 = vpop.f32.mrb[0].mxu0
    %v724 = vadd.f32 %v671, %v723
    %v725 = vpop.f32.mrb[0].mxu0
    %v726 = vadd.f32 %v673, %v725
    %v727 = vpop.f32.mrb[0].mxu0
    %v728 = vadd.f32 %v675, %v727
    %v729 = vpop.f32.mrb[0].mxu0
    %v730 = vadd.f32 %v677, %v729
    %731 = vdwg.mxu0
    %v732 = vmax.f32 %v714, 0.0
    %v733 = vmax.f32 %v716, 0.0
    %v734 = vmax.f32 %v718, 0.0
    %v735 = vmax.f32 %v720, 0.0
    %v736 = vmax.f32 %v724, 0.0
    %v737 = vmax.f32 %v726, 0.0
    %v738 = vmax.f32 %v728, 0.0
    %v739 = vmax.f32 %v730, 0.0
    %v740 = vrot.slane %v732, 7
    %v741 = vrot.slane %v733, 7
    %v742 = vrot.slane %v734, 7
    %v743 = vrot.slane %v735, 7
    %v744 = vrot.slane %v736, 7
    %v745 = vrot.slane %v737, 7
    %v746 = vrot.slane %v738, 7
    %v747 = vrot.slane %v739, 7
    %v748 = vsel %vm258, %v744, %v746
    %v749 = vsel %vm258, %v745, %v747
    %v750 = vsel %vm258, %v742, %v744
    %v751 = vsel %vm258, %v743, %v745
    %v752 = vsel %vm258, %v740, %v742
    %v753 = vsel %vm258, %v741, %v743
    %v754 = vsel %vm258, %v746, %v740
    %v755 = vsel %vm258, %v747, %v741
    %v756 = vmul.f32 %v754, %v266
    %v757 = vmul.f32 %v755, %v266
    %v758 = vmul.f32 %v752, %v271
    %v759 = vmul.f32 %v753, %v271
    %v760 = vmul.f32 %v750, %v276
    %v761 = vmul.f32 %v751, %v276
    %v762 = vmul.f32 %v748, %v281
    %v763 = vmul.f32 %v749, %v281
    %v764 = vrot.slane %v732, 1
    %v765 = vrot.slane %v733, 1
    %v766 = vrot.slane %v734, 1
    %v767 = vrot.slane %v735, 1
    %v768 = vrot.slane %v736, 1
    %v769 = vrot.slane %v737, 1
    %v770 = vrot.slane %v738, 1
    %v771 = vrot.slane %v739, 1
    %v772 = vsel %vm291, %v768, %v770
    %v773 = vsel %vm291, %v769, %v771
    %v774 = vsel %vm291, %v766, %v768
    %v775 = vsel %vm291, %v767, %v769
    %v776 = vsel %vm291, %v764, %v766
    %v777 = vsel %vm291, %v765, %v767
    %v778 = vsel %vm291, %v770, %v764
    %v779 = vsel %vm291, %v771, %v765
    %v780 = vmul.f32 %v776, %v299
    %v781 = vmul.f32 %v777, %v299
    %v782 = vmul.f32 %v774, %v304
    %v783 = vmul.f32 %v775, %v304
    %v784 = vmul.f32 %v772, %v309
    %v785 = vmul.f32 %v773, %v309
    %v786 = vmul.f32 %v778, %v314
    %v787 = vmul.f32 %v779, %v314
    %v788 = vpack.c.bf16 %v758, %v756
    %v789 = vpack.c.bf16 %v759, %v757
    %v790 = vpack.c.bf16 %v762, %v760
    %v791 = vpack.c.bf16 %v763, %v761
    %v792 = vld [vmem:[%s8] sm:$0xff]
    %v793 = vld [vmem:[%s8 + $0x8] sm:$0xff]
    %v794 = vld [vmem:[%s8 + $0x10] sm:$0xff]
    %v795 = vld [vmem:[%s8 + $0x18] sm:$0xff]
    %v796 = vld [vmem:[%s8 + $0x20] sm:$0xff]
    %v797 = vld [vmem:[%s8 + $0x28] sm:$0xff]
    %v798 = vld [vmem:[%s8 + $0x30] sm:$0xff]
    %v799 = vld [vmem:[%s8 + $0x38] sm:$0xff]
    %v800 = vld [vmem:[%s8 + $0x40] sm:$0xff]
    %v801 = vld [vmem:[%s8 + $0x48] sm:$0xff]
    %v802 = vld [vmem:[%s8 + $0x50] sm:$0xff]
    %v803 = vld [vmem:[%s8 + $0x58] sm:$0xff]
    %v804 = vld [vmem:[%s8 + $0x60] sm:$0xff]
    %v805 = vld [vmem:[%s8 + $0x68] sm:$0xff]
    %v806 = vld [vmem:[%s8 + $0x70] sm:$0xff]
    %v807 = vld [vmem:[%s8 + $0x78] sm:$0xff]
    %v808 = vld [vmem:[%s8 + $0x80] sm:$0xff]
    %v809 = vld [vmem:[%s8 + $0x88] sm:$0xff]
    %v810 = vld [vmem:[%s8 + $0x90] sm:$0xff]
    %v811 = vld [vmem:[%s8 + $0x98] sm:$0xff]
    %v812 = vld [vmem:[%s8 + $0xa0] sm:$0xff]
    %v813 = vld [vmem:[%s8 + $0xa8] sm:$0xff]
    %v814 = vld [vmem:[%s8 + $0xb0] sm:$0xff]
    %v815 = vld [vmem:[%s8 + $0xb8] sm:$0xff]
    %v816 = vld [vmem:[%s8 + $0xc0] sm:$0xff]
    %v817 = vld [vmem:[%s8 + $0xc8] sm:$0xff]
    %v818 = vld [vmem:[%s8 + $0xd0] sm:$0xff]
    %v819 = vld [vmem:[%s8 + $0xd8] sm:$0xff]
    %v820 = vld [vmem:[%s8 + $0xe0] sm:$0xff]
    %v821 = vld [vmem:[%s8 + $0xe8] sm:$0xff]
    %v822 = vld [vmem:[%s8 + $0xf0] sm:$0xff]
    %v823 = vld [vmem:[%s8 + $0xf8] sm:$0xff]
    %v824 = vpack.c.bf16 %v734, %v732
    %v825 = vpack.c.bf16 %v735, %v733
    %v826 = vpack.c.bf16 %v738, %v736
    %v827 = vpack.c.bf16 %v739, %v737
    %s828 = scalar_lea.vmem %s8, 256
    %v829 = vld [vmem:[%s828] sm:$0xff]
    %v830 = vld [vmem:[%s828 + $0x8] sm:$0xff]
    %v831 = vld [vmem:[%s828 + $0x10] sm:$0xff]
    %v832 = vld [vmem:[%s828 + $0x18] sm:$0xff]
    %v833 = vld [vmem:[%s828 + $0x20] sm:$0xff]
    %v834 = vld [vmem:[%s828 + $0x28] sm:$0xff]
    %v835 = vld [vmem:[%s828 + $0x30] sm:$0xff]
    %v836 = vld [vmem:[%s828 + $0x38] sm:$0xff]
    %v837 = vld [vmem:[%s828 + $0x40] sm:$0xff]
    %v838 = vld [vmem:[%s828 + $0x48] sm:$0xff]
    %v839 = vld [vmem:[%s828 + $0x50] sm:$0xff]
    %v840 = vld [vmem:[%s828 + $0x58] sm:$0xff]
    %v841 = vld [vmem:[%s828 + $0x60] sm:$0xff]
    %v842 = vld [vmem:[%s828 + $0x68] sm:$0xff]
    %v843 = vld [vmem:[%s828 + $0x70] sm:$0xff]
    %v844 = vld [vmem:[%s828 + $0x78] sm:$0xff]
    %v845 = vld [vmem:[%s828 + $0x80] sm:$0xff]
    %v846 = vld [vmem:[%s828 + $0x88] sm:$0xff]
    %v847 = vld [vmem:[%s828 + $0x90] sm:$0xff]
    %v848 = vld [vmem:[%s828 + $0x98] sm:$0xff]
    %v849 = vld [vmem:[%s828 + $0xa0] sm:$0xff]
    %v850 = vld [vmem:[%s828 + $0xa8] sm:$0xff]
    %v851 = vld [vmem:[%s828 + $0xb0] sm:$0xff]
    %v852 = vld [vmem:[%s828 + $0xb8] sm:$0xff]
    %v853 = vld [vmem:[%s828 + $0xc0] sm:$0xff]
    %v854 = vld [vmem:[%s828 + $0xc8] sm:$0xff]
    %v855 = vld [vmem:[%s828 + $0xd0] sm:$0xff]
    %v856 = vld [vmem:[%s828 + $0xd8] sm:$0xff]
    %v857 = vld [vmem:[%s828 + $0xe0] sm:$0xff]
    %v858 = vld [vmem:[%s828 + $0xe8] sm:$0xff]
    %v859 = vld [vmem:[%s828 + $0xf0] sm:$0xff]
    %v860 = vld [vmem:[%s828 + $0xf8] sm:$0xff]
    %v893 = vunpack.c.l.b16 %v829
    %v894 = vunpack.c.h.b16 %v829
    %v895 = vunpack.c.l.b16 %v830
    %v896 = vunpack.c.h.b16 %v830
    %v897 = vunpack.c.l.b16 %v831
    %v898 = vunpack.c.h.b16 %v831
    %v899 = vunpack.c.l.b16 %v832
    %v900 = vunpack.c.h.b16 %v832
    %v901 = vunpack.c.l.b16 %v833
    %v902 = vunpack.c.h.b16 %v833
    %v903 = vunpack.c.l.b16 %v834
    %v904 = vunpack.c.h.b16 %v834
    %v905 = vunpack.c.l.b16 %v835
    %v906 = vunpack.c.h.b16 %v835
    %v907 = vunpack.c.l.b16 %v836
    %v908 = vunpack.c.h.b16 %v836
    %v909 = vunpack.c.l.b16 %v837
    %v910 = vunpack.c.h.b16 %v837
    %v911 = vunpack.c.l.b16 %v838
    %v912 = vunpack.c.h.b16 %v838
    %v913 = vunpack.c.l.b16 %v839
    %v914 = vunpack.c.h.b16 %v839
    %v915 = vunpack.c.l.b16 %v840
    %v916 = vunpack.c.h.b16 %v840
    %v917 = vunpack.c.l.b16 %v841
    %v918 = vunpack.c.h.b16 %v841
    %v919 = vunpack.c.l.b16 %v842
    %v920 = vunpack.c.h.b16 %v842
    %v921 = vunpack.c.l.b16 %v843
    %v922 = vunpack.c.h.b16 %v843
    %v923 = vunpack.c.l.b16 %v844
    %v924 = vunpack.c.h.b16 %v844
    %v925 = vunpack.c.l.b16 %v845
    %v926 = vunpack.c.h.b16 %v845
    %v927 = vunpack.c.l.b16 %v846
    %v928 = vunpack.c.h.b16 %v846
    %v929 = vunpack.c.l.b16 %v847
    %v930 = vunpack.c.h.b16 %v847
    %v931 = vunpack.c.l.b16 %v848
    %v932 = vunpack.c.h.b16 %v848
    %v933 = vunpack.c.l.b16 %v849
    %v934 = vunpack.c.h.b16 %v849
    %v935 = vunpack.c.l.b16 %v850
    %v936 = vunpack.c.h.b16 %v850
    %v937 = vunpack.c.l.b16 %v851
    %v938 = vunpack.c.h.b16 %v851
    %v939 = vunpack.c.l.b16 %v852
    %v940 = vunpack.c.h.b16 %v852
    %v941 = vunpack.c.l.b16 %v853
    %v942 = vunpack.c.h.b16 %v853
    %v943 = vunpack.c.l.b16 %v854
    %v944 = vunpack.c.h.b16 %v854
    %v945 = vunpack.c.l.b16 %v855
    %v946 = vunpack.c.h.b16 %v855
    %v947 = vunpack.c.l.b16 %v856
    %v948 = vunpack.c.h.b16 %v856
    %v949 = vunpack.c.l.b16 %v857
    %v950 = vunpack.c.h.b16 %v857
    %v951 = vunpack.c.l.b16 %v858
    %v952 = vunpack.c.h.b16 %v858
    %v953 = vunpack.c.l.b16 %v859
    %v954 = vunpack.c.h.b16 %v859
    %v955 = vunpack.c.l.b16 %v860
    %v956 = vunpack.c.h.b16 %v860
    %v957 = vpack.c.b16 %v895, %v893
    %v958 = vpack.c.b16 %v896, %v894
    %v959 = vpack.c.b16 %v899, %v897
    %v960 = vpack.c.b16 %v900, %v898
    %v961 = vpack.c.b16 %v903, %v901
    %v962 = vpack.c.b16 %v904, %v902
    %v963 = vpack.c.b16 %v907, %v905
    %v964 = vpack.c.b16 %v908, %v906
    %v965 = vpack.c.b16 %v911, %v909
    %v966 = vpack.c.b16 %v912, %v910
    %v967 = vpack.c.b16 %v915, %v913
    %v968 = vpack.c.b16 %v916, %v914
    %v969 = vpack.c.b16 %v919, %v917
    %v970 = vpack.c.b16 %v920, %v918
    %v971 = vpack.c.b16 %v923, %v921
    %v972 = vpack.c.b16 %v924, %v922
    %v973 = vpack.c.b16 %v927, %v925
    %v974 = vpack.c.b16 %v928, %v926
    %v975 = vpack.c.b16 %v931, %v929
    %v976 = vpack.c.b16 %v932, %v930
    %v977 = vpack.c.b16 %v935, %v933
    %v978 = vpack.c.b16 %v936, %v934
    %v979 = vpack.c.b16 %v939, %v937
    %v980 = vpack.c.b16 %v940, %v938
    %v981 = vpack.c.b16 %v943, %v941
    %v982 = vpack.c.b16 %v944, %v942
    %v983 = vpack.c.b16 %v947, %v945
    %v984 = vpack.c.b16 %v948, %v946
    %v985 = vpack.c.b16 %v951, %v949
    %v986 = vpack.c.b16 %v952, %v950
    %v987 = vpack.c.b16 %v955, %v953
    %v988 = vpack.c.b16 %v956, %v954
    %1021 = vmatprep.subr.bf16.mxu0 %v958
    %1022 = vmatpush1.bf16.msra.mxu0 %v957
    %1023 = vmatprep.subr.bf16.mxu0 %v960
    %1024 = vmatpush1.bf16.msra.mxu0 %v959
    %1025 = vmatprep.subr.bf16.mxu0 %v962
    %1026 = vmatpush1.bf16.msra.mxu0 %v961
    %1027 = vmatprep.subr.bf16.mxu0 %v964
    %1028 = vmatpush1.bf16.msra.mxu0 %v963
    %1029 = vmatprep.subr.bf16.mxu0 %v966
    %1030 = vmatpush1.bf16.msra.mxu0 %v965
    %1031 = vmatprep.subr.bf16.mxu0 %v968
    %1032 = vmatpush1.bf16.msra.mxu0 %v967
    %1033 = vmatprep.subr.bf16.mxu0 %v970
    %1034 = vmatpush1.bf16.msra.mxu0 %v969
    %1035 = vmatprep.subr.bf16.mxu0 %v972
    %1036 = vmatpush1.bf16.msra.mxu0 %v971
    %1037 = vmatprep.subr.bf16.mxu0 %v974
    %1038 = vmatpush1.bf16.msra.mxu0 %v973
    %1039 = vmatprep.subr.bf16.mxu0 %v976
    %1040 = vmatpush1.bf16.msra.mxu0 %v975
    %1041 = vmatprep.subr.bf16.mxu0 %v978
    %1042 = vmatpush1.bf16.msra.mxu0 %v977
    %1043 = vmatprep.subr.bf16.mxu0 %v980
    %1044 = vmatpush1.bf16.msra.mxu0 %v979
    %1045 = vmatprep.subr.bf16.mxu0 %v982
    %1046 = vmatpush1.bf16.msra.mxu0 %v981
    %1047 = vmatprep.subr.bf16.mxu0 %v984
    %1048 = vmatpush1.bf16.msra.mxu0 %v983
    %1049 = vmatprep.subr.bf16.mxu0 %v986
    %1050 = vmatpush1.bf16.msra.mxu0 %v985
    %1051 = vmatprep.subr.bf16.mxu0 %v988
    %1052 = vmatpush1.bf16.msra.mxu0 %v987
    %1053 = vmatprep.mubr.bf16.mxu0 %v825
    %1054 = vmatmul.mubr.bf16.gmra.mrb[0].mxu0 %v824
    %v1055 = vpop.f32.mrb[0].mxu0
    %v1056 = vadd.f32 0.0, %v1055
    %v1057 = vpop.f32.mrb[0].mxu0
    %v1058 = vadd.f32 0.0, %v1057
    %v1059 = vpop.f32.mrb[0].mxu0
    %v1060 = vadd.f32 0.0, %v1059
    %v1061 = vpop.f32.mrb[0].mxu0
    %v1062 = vadd.f32 0.0, %v1061
    %1063 = vmatprep.mubr.bf16.mxu0 %v827
    %1064 = vmatmul.mubr.bf16.gmra.mrb[0].mxu0 %v826
    %v1065 = vpop.f32.mrb[0].mxu0
    %v1066 = vadd.f32 0.0, %v1065
    %v1067 = vpop.f32.mrb[0].mxu0
    %v1068 = vadd.f32 0.0, %v1067
    %v1069 = vpop.f32.mrb[0].mxu0
    %v1070 = vadd.f32 0.0, %v1069
    %v1071 = vpop.f32.mrb[0].mxu0
    %v1072 = vadd.f32 0.0, %v1071
    %1073 = vdwg.mxu0
    %v1106 = vunpack.c.l.b16 %v792
    %v1107 = vunpack.c.h.b16 %v792
    %v1108 = vunpack.c.l.b16 %v793
    %v1109 = vunpack.c.h.b16 %v793
    %v1110 = vunpack.c.l.b16 %v794
    %v1111 = vunpack.c.h.b16 %v794
    %v1112 = vunpack.c.l.b16 %v795
    %v1113 = vunpack.c.h.b16 %v795
    %v1114 = vunpack.c.l.b16 %v796
    %v1115 = vunpack.c.h.b16 %v796
    %v1116 = vunpack.c.l.b16 %v797
    %v1117 = vunpack.c.h.b16 %v797
    %v1118 = vunpack.c.l.b16 %v798
    %v1119 = vunpack.c.h.b16 %v798
    %v1120 = vunpack.c.l.b16 %v799
    %v1121 = vunpack.c.h.b16 %v799
    %v1122 = vunpack.c.l.b16 %v800
    %v1123 = vunpack.c.h.b16 %v800
    %v1124 = vunpack.c.l.b16 %v801
    %v1125 = vunpack.c.h.b16 %v801
    %v1126 = vunpack.c.l.b16 %v802
    %v1127 = vunpack.c.h.b16 %v802
    %v1128 = vunpack.c.l.b16 %v803
    %v1129 = vunpack.c.h.b16 %v803
    %v1130 = vunpack.c.l.b16 %v804
    %v1131 = vunpack.c.h.b16 %v804
    %v1132 = vunpack.c.l.b16 %v805
    %v1133 = vunpack.c.h.b16 %v805
    %v1134 = vunpack.c.l.b16 %v806
    %v1135 = vunpack.c.h.b16 %v806
    %v1136 = vunpack.c.l.b16 %v807
    %v1137 = vunpack.c.h.b16 %v807
    %v1138 = vunpack.c.l.b16 %v808
    %v1139 = vunpack.c.h.b16 %v808
    %v1140 = vunpack.c.l.b16 %v809
    %v1141 = vunpack.c.h.b16 %v809
    %v1142 = vunpack.c.l.b16 %v810
    %v1143 = vunpack.c.h.b16 %v810
    %v1144 = vunpack.c.l.b16 %v811
    %v1145 = vunpack.c.h.b16 %v811
    %v1146 = vunpack.c.l.b16 %v812
    %v1147 = vunpack.c.h.b16 %v812
    %v1148 = vunpack.c.l.b16 %v813
    %v1149 = vunpack.c.h.b16 %v813
    %v1150 = vunpack.c.l.b16 %v814
    %v1151 = vunpack.c.h.b16 %v814
    %v1152 = vunpack.c.l.b16 %v815
    %v1153 = vunpack.c.h.b16 %v815
    %v1154 = vunpack.c.l.b16 %v816
    %v1155 = vunpack.c.h.b16 %v816
    %v1156 = vunpack.c.l.b16 %v817
    %v1157 = vunpack.c.h.b16 %v817
    %v1158 = vunpack.c.l.b16 %v818
    %v1159 = vunpack.c.h.b16 %v818
    %v1160 = vunpack.c.l.b16 %v819
    %v1161 = vunpack.c.h.b16 %v819
    %v1162 = vunpack.c.l.b16 %v820
    %v1163 = vunpack.c.h.b16 %v820
    %v1164 = vunpack.c.l.b16 %v821
    %v1165 = vunpack.c.h.b16 %v821
    %v1166 = vunpack.c.l.b16 %v822
    %v1167 = vunpack.c.h.b16 %v822
    %v1168 = vunpack.c.l.b16 %v823
    %v1169 = vunpack.c.h.b16 %v823
    %v1170 = vpack.c.b16 %v1108, %v1106
    %v1171 = vpack.c.b16 %v1109, %v1107
    %v1172 = vpack.c.b16 %v1112, %v1110
    %v1173 = vpack.c.b16 %v1113, %v1111
    %v1174 = vpack.c.b16 %v1116, %v1114
    %v1175 = vpack.c.b16 %v1117, %v1115
    %v1176 = vpack.c.b16 %v1120, %v1118
    %v1177 = vpack.c.b16 %v1121, %v1119
    %v1178 = vpack.c.b16 %v1124, %v1122
    %v1179 = vpack.c.b16 %v1125, %v1123
    %v1180 = vpack.c.b16 %v1128, %v1126
    %v1181 = vpack.c.b16 %v1129, %v1127
    %v1182 = vpack.c.b16 %v1132, %v1130
    %v1183 = vpack.c.b16 %v1133, %v1131
    %v1184 = vpack.c.b16 %v1136, %v1134
    %v1185 = vpack.c.b16 %v1137, %v1135
    %v1186 = vpack.c.b16 %v1140, %v1138
    %v1187 = vpack.c.b16 %v1141, %v1139
    %v1188 = vpack.c.b16 %v1144, %v1142
    %v1189 = vpack.c.b16 %v1145, %v1143
    %v1190 = vpack.c.b16 %v1148, %v1146
    %v1191 = vpack.c.b16 %v1149, %v1147
    %v1192 = vpack.c.b16 %v1152, %v1150
    %v1193 = vpack.c.b16 %v1153, %v1151
    %v1194 = vpack.c.b16 %v1156, %v1154
    %v1195 = vpack.c.b16 %v1157, %v1155
    %v1196 = vpack.c.b16 %v1160, %v1158
    %v1197 = vpack.c.b16 %v1161, %v1159
    %v1198 = vpack.c.b16 %v1164, %v1162
    %v1199 = vpack.c.b16 %v1165, %v1163
    %v1200 = vpack.c.b16 %v1168, %v1166
    %v1201 = vpack.c.b16 %v1169, %v1167
    %1234 = vmatprep.subr.bf16.mxu0 %v1171
    %1235 = vmatpush1.bf16.msra.mxu0 %v1170
    %1236 = vmatprep.subr.bf16.mxu0 %v1173
    %1237 = vmatpush1.bf16.msra.mxu0 %v1172
    %1238 = vmatprep.subr.bf16.mxu0 %v1175
    %1239 = vmatpush1.bf16.msra.mxu0 %v1174
    %1240 = vmatprep.subr.bf16.mxu0 %v1177
    %1241 = vmatpush1.bf16.msra.mxu0 %v1176
    %1242 = vmatprep.subr.bf16.mxu0 %v1179
    %1243 = vmatpush1.bf16.msra.mxu0 %v1178
    %1244 = vmatprep.subr.bf16.mxu0 %v1181
    %1245 = vmatpush1.bf16.msra.mxu0 %v1180
    %1246 = vmatprep.subr.bf16.mxu0 %v1183
    %1247 = vmatpush1.bf16.msra.mxu0 %v1182
    %1248 = vmatprep.subr.bf16.mxu0 %v1185
    %1249 = vmatpush1.bf16.msra.mxu0 %v1184
    %1250 = vmatprep.subr.bf16.mxu0 %v1187
    %1251 = vmatpush1.bf16.msra.mxu0 %v1186
    %1252 = vmatprep.subr.bf16.mxu0 %v1189
    %1253 = vmatpush1.bf16.msra.mxu0 %v1188
    %1254 = vmatprep.subr.bf16.mxu0 %v1191
    %1255 = vmatpush1.bf16.msra.mxu0 %v1190
    %1256 = vmatprep.subr.bf16.mxu0 %v1193
    %1257 = vmatpush1.bf16.msra.mxu0 %v1192
    %1258 = vmatprep.subr.bf16.mxu0 %v1195
    %1259 = vmatpush1.bf16.msra.mxu0 %v1194
    %1260 = vmatprep.subr.bf16.mxu0 %v1197
    %1261 = vmatpush1.bf16.msra.mxu0 %v1196
    %1262 = vmatprep.subr.bf16.mxu0 %v1199
    %1263 = vmatpush1.bf16.msra.mxu0 %v1198
    %1264 = vmatprep.subr.bf16.mxu0 %v1201
    %1265 = vmatpush1.bf16.msra.mxu0 %v1200
    %1266 = vmatprep.mubr.bf16.mxu0 %v789
    %1267 = vmatmul.mubr.bf16.gmra.mrb[0].mxu0 %v788
    %v1268 = vpop.f32.mrb[0].mxu0
    %v1269 = vadd.f32 %v1056, %v1268
    %v1270 = vpop.f32.mrb[0].mxu0
    %v1271 = vadd.f32 %v1058, %v1270
    %v1272 = vpop.f32.mrb[0].mxu0
    %v1273 = vadd.f32 %v1060, %v1272
    %v1274 = vpop.f32.mrb[0].mxu0
    %v1275 = vadd.f32 %v1062, %v1274
    %1276 = vmatprep.mubr.bf16.mxu0 %v791
    %1277 = vmatmul.mubr.bf16.gmra.mrb[0].mxu0 %v790
    %v1278 = vpop.f32.mrb[0].mxu0
    %v1279 = vadd.f32 %v1066, %v1278
    %v1280 = vpop.f32.mrb[0].mxu0
    %v1281 = vadd.f32 %v1068, %v1280
    %v1282 = vpop.f32.mrb[0].mxu0
    %v1283 = vadd.f32 %v1070, %v1282
    %v1284 = vpop.f32.mrb[0].mxu0
    %v1285 = vadd.f32 %v1072, %v1284
    %1286 = vdwg.mxu0
    %v1287 = vpack.c.bf16 %v782, %v780
    %v1288 = vpack.c.bf16 %v783, %v781
    %v1289 = vpack.c.bf16 %v786, %v784
    %v1290 = vpack.c.bf16 %v787, %v785
    %s1291 = scalar_lea.vmem %s8, 512
    %v1292 = vld [vmem:[%s1291] sm:$0xff]
    %v1293 = vld [vmem:[%s1291 + $0x8] sm:$0xff]
    %v1294 = vld [vmem:[%s1291 + $0x10] sm:$0xff]
    %v1295 = vld [vmem:[%s1291 + $0x18] sm:$0xff]
    %v1296 = vld [vmem:[%s1291 + $0x20] sm:$0xff]
    %v1297 = vld [vmem:[%s1291 + $0x28] sm:$0xff]
    %v1298 = vld [vmem:[%s1291 + $0x30] sm:$0xff]
    %v1299 = vld [vmem:[%s1291 + $0x38] sm:$0xff]
    %v1300 = vld [vmem:[%s1291 + $0x40] sm:$0xff]
    %v1301 = vld [vmem:[%s1291 + $0x48] sm:$0xff]
    %v1302 = vld [vmem:[%s1291 + $0x50] sm:$0xff]
    %v1303 = vld [vmem:[%s1291 + $0x58] sm:$0xff]
    %v1304 = vld [vmem:[%s1291 + $0x60] sm:$0xff]
    %v1305 = vld [vmem:[%s1291 + $0x68] sm:$0xff]
    %v1306 = vld [vmem:[%s1291 + $0x70] sm:$0xff]
    %v1307 = vld [vmem:[%s1291 + $0x78] sm:$0xff]
    %v1308 = vld [vmem:[%s1291 + $0x80] sm:$0xff]
    %v1309 = vld [vmem:[%s1291 + $0x88] sm:$0xff]
    %v1310 = vld [vmem:[%s1291 + $0x90] sm:$0xff]
    %v1311 = vld [vmem:[%s1291 + $0x98] sm:$0xff]
    %v1312 = vld [vmem:[%s1291 + $0xa0] sm:$0xff]
    %v1313 = vld [vmem:[%s1291 + $0xa8] sm:$0xff]
    %v1314 = vld [vmem:[%s1291 + $0xb0] sm:$0xff]
    %v1315 = vld [vmem:[%s1291 + $0xb8] sm:$0xff]
    %v1316 = vld [vmem:[%s1291 + $0xc0] sm:$0xff]
    %v1317 = vld [vmem:[%s1291 + $0xc8] sm:$0xff]
    %v1318 = vld [vmem:[%s1291 + $0xd0] sm:$0xff]
    %v1319 = vld [vmem:[%s1291 + $0xd8] sm:$0xff]
    %v1320 = vld [vmem:[%s1291 + $0xe0] sm:$0xff]
    %v1321 = vld [vmem:[%s1291 + $0xe8] sm:$0xff]
    %v1322 = vld [vmem:[%s1291 + $0xf0] sm:$0xff]
    %v1323 = vld [vmem:[%s1291 + $0xf8] sm:$0xff]
    %v1356 = vunpack.c.l.b16 %v1292
    %v1357 = vunpack.c.h.b16 %v1292
    %v1358 = vunpack.c.l.b16 %v1293
    %v1359 = vunpack.c.h.b16 %v1293
    %v1360 = vunpack.c.l.b16 %v1294
    %v1361 = vunpack.c.h.b16 %v1294
    %v1362 = vunpack.c.l.b16 %v1295
    %v1363 = vunpack.c.h.b16 %v1295
    %v1364 = vunpack.c.l.b16 %v1296
    %v1365 = vunpack.c.h.b16 %v1296
    %v1366 = vunpack.c.l.b16 %v1297
    %v1367 = vunpack.c.h.b16 %v1297
    %v1368 = vunpack.c.l.b16 %v1298
    %v1369 = vunpack.c.h.b16 %v1298
    %v1370 = vunpack.c.l.b16 %v1299
    %v1371 = vunpack.c.h.b16 %v1299
    %v1372 = vunpack.c.l.b16 %v1300
    %v1373 = vunpack.c.h.b16 %v1300
    %v1374 = vunpack.c.l.b16 %v1301
    %v1375 = vunpack.c.h.b16 %v1301
    %v1376 = vunpack.c.l.b16 %v1302
    %v1377 = vunpack.c.h.b16 %v1302
    %v1378 = vunpack.c.l.b16 %v1303
    %v1379 = vunpack.c.h.b16 %v1303
    %v1380 = vunpack.c.l.b16 %v1304
    %v1381 = vunpack.c.h.b16 %v1304
    %v1382 = vunpack.c.l.b16 %v1305
    %v1383 = vunpack.c.h.b16 %v1305
    %v1384 = vunpack.c.l.b16 %v1306
    %v1385 = vunpack.c.h.b16 %v1306
    %v1386 = vunpack.c.l.b16 %v1307
    %v1387 = vunpack.c.h.b16 %v1307
    %v1388 = vunpack.c.l.b16 %v1308
    %v1389 = vunpack.c.h.b16 %v1308
    %v1390 = vunpack.c.l.b16 %v1309
    %v1391 = vunpack.c.h.b16 %v1309
    %v1392 = vunpack.c.l.b16 %v1310
    %v1393 = vunpack.c.h.b16 %v1310
    %v1394 = vunpack.c.l.b16 %v1311
    %v1395 = vunpack.c.h.b16 %v1311
    %v1396 = vunpack.c.l.b16 %v1312
    %v1397 = vunpack.c.h.b16 %v1312
    %v1398 = vunpack.c.l.b16 %v1313
    %v1399 = vunpack.c.h.b16 %v1313
    %v1400 = vunpack.c.l.b16 %v1314
    %v1401 = vunpack.c.h.b16 %v1314
    %v1402 = vunpack.c.l.b16 %v1315
    %v1403 = vunpack.c.h.b16 %v1315
    %v1404 = vunpack.c.l.b16 %v1316
    %v1405 = vunpack.c.h.b16 %v1316
    %v1406 = vunpack.c.l.b16 %v1317
    %v1407 = vunpack.c.h.b16 %v1317
    %v1408 = vunpack.c.l.b16 %v1318
    %v1409 = vunpack.c.h.b16 %v1318
    %v1410 = vunpack.c.l.b16 %v1319
    %v1411 = vunpack.c.h.b16 %v1319
    %v1412 = vunpack.c.l.b16 %v1320
    %v1413 = vunpack.c.h.b16 %v1320
    %v1414 = vunpack.c.l.b16 %v1321
    %v1415 = vunpack.c.h.b16 %v1321
    %v1416 = vunpack.c.l.b16 %v1322
    %v1417 = vunpack.c.h.b16 %v1322
    %v1418 = vunpack.c.l.b16 %v1323
    %v1419 = vunpack.c.h.b16 %v1323
    %v1420 = vpack.c.b16 %v1358, %v1356
    %v1421 = vpack.c.b16 %v1359, %v1357
    %v1422 = vpack.c.b16 %v1362, %v1360
    %v1423 = vpack.c.b16 %v1363, %v1361
    %v1424 = vpack.c.b16 %v1366, %v1364
    %v1425 = vpack.c.b16 %v1367, %v1365
    %v1426 = vpack.c.b16 %v1370, %v1368
    %v1427 = vpack.c.b16 %v1371, %v1369
    %v1428 = vpack.c.b16 %v1374, %v1372
    %v1429 = vpack.c.b16 %v1375, %v1373
    %v1430 = vpack.c.b16 %v1378, %v1376
    %v1431 = vpack.c.b16 %v1379, %v1377
    %v1432 = vpack.c.b16 %v1382, %v1380
    %v1433 = vpack.c.b16 %v1383, %v1381
    %v1434 = vpack.c.b16 %v1386, %v1384
    %v1435 = vpack.c.b16 %v1387, %v1385
    %v1436 = vpack.c.b16 %v1390, %v1388
    %v1437 = vpack.c.b16 %v1391, %v1389
    %v1438 = vpack.c.b16 %v1394, %v1392
    %v1439 = vpack.c.b16 %v1395, %v1393
    %v1440 = vpack.c.b16 %v1398, %v1396
    %v1441 = vpack.c.b16 %v1399, %v1397
    %v1442 = vpack.c.b16 %v1402, %v1400
    %v1443 = vpack.c.b16 %v1403, %v1401
    %v1444 = vpack.c.b16 %v1406, %v1404
    %v1445 = vpack.c.b16 %v1407, %v1405
    %v1446 = vpack.c.b16 %v1410, %v1408
    %v1447 = vpack.c.b16 %v1411, %v1409
    %v1448 = vpack.c.b16 %v1414, %v1412
    %v1449 = vpack.c.b16 %v1415, %v1413
    %v1450 = vpack.c.b16 %v1418, %v1416
    %v1451 = vpack.c.b16 %v1419, %v1417
    %1484 = vmatprep.subr.bf16.mxu0 %v1421
    %1485 = vmatpush1.bf16.msra.mxu0 %v1420
    %1486 = vmatprep.subr.bf16.mxu0 %v1423
    %1487 = vmatpush1.bf16.msra.mxu0 %v1422
    %1488 = vmatprep.subr.bf16.mxu0 %v1425
    %1489 = vmatpush1.bf16.msra.mxu0 %v1424
    %1490 = vmatprep.subr.bf16.mxu0 %v1427
    %1491 = vmatpush1.bf16.msra.mxu0 %v1426
    %1492 = vmatprep.subr.bf16.mxu0 %v1429
    %1493 = vmatpush1.bf16.msra.mxu0 %v1428
    %1494 = vmatprep.subr.bf16.mxu0 %v1431
    %1495 = vmatpush1.bf16.msra.mxu0 %v1430
    %1496 = vmatprep.subr.bf16.mxu0 %v1433
    %1497 = vmatpush1.bf16.msra.mxu0 %v1432
    %1498 = vmatprep.subr.bf16.mxu0 %v1435
    %1499 = vmatpush1.bf16.msra.mxu0 %v1434
    %1500 = vmatprep.subr.bf16.mxu0 %v1437
    %1501 = vmatpush1.bf16.msra.mxu0 %v1436
    %1502 = vmatprep.subr.bf16.mxu0 %v1439
    %1503 = vmatpush1.bf16.msra.mxu0 %v1438
    %1504 = vmatprep.subr.bf16.mxu0 %v1441
    %1505 = vmatpush1.bf16.msra.mxu0 %v1440
    %1506 = vmatprep.subr.bf16.mxu0 %v1443
    %1507 = vmatpush1.bf16.msra.mxu0 %v1442
    %1508 = vmatprep.subr.bf16.mxu0 %v1445
    %1509 = vmatpush1.bf16.msra.mxu0 %v1444
    %1510 = vmatprep.subr.bf16.mxu0 %v1447
    %1511 = vmatpush1.bf16.msra.mxu0 %v1446
    %1512 = vmatprep.subr.bf16.mxu0 %v1449
    %1513 = vmatpush1.bf16.msra.mxu0 %v1448
    %1514 = vmatprep.subr.bf16.mxu0 %v1451
    %1515 = vmatpush1.bf16.msra.mxu0 %v1450
    %1516 = vmatprep.mubr.bf16.mxu0 %v1288
    %1517 = vmatmul.mubr.bf16.gmra.mrb[0].mxu0 %v1287
    %v1518 = vpop.f32.mrb[0].mxu0
    %v1519 = vadd.f32 0.0, %v1518
    %v1520 = vpop.f32.mrb[0].mxu0
    %v1521 = vadd.f32 0.0, %v1520
    %v1522 = vpop.f32.mrb[0].mxu0
    %v1523 = vadd.f32 0.0, %v1522
    %v1524 = vpop.f32.mrb[0].mxu0
    %v1525 = vadd.f32 0.0, %v1524
    %1526 = vmatprep.mubr.bf16.mxu0 %v1290
    %1527 = vmatmul.mubr.bf16.gmra.mrb[0].mxu0 %v1289
    %v1528 = vpop.f32.mrb[0].mxu0
    %v1529 = vadd.f32 0.0, %v1528
    %v1530 = vpop.f32.mrb[0].mxu0
    %v1531 = vadd.f32 0.0, %v1530
    %v1532 = vpop.f32.mrb[0].mxu0
    %v1533 = vadd.f32 0.0, %v1532
    %v1534 = vpop.f32.mrb[0].mxu0
    %v1535 = vadd.f32 0.0, %v1534
    %1536 = vdwg.mxu0
    %v1537 = vadd.f32 %v1269, %v1519
    %v1538 = vadd.f32 %v1271, %v1521
    %v1539 = vadd.f32 %v1273, %v1523
    %v1540 = vadd.f32 %v1275, %v1525
    %v1541 = vadd.f32 %v1279, %v1529
    %v1542 = vadd.f32 %v1281, %v1531
    %v1543 = vadd.f32 %v1283, %v1533
    %v1544 = vadd.f32 %v1285, %v1535
    %v1545 = vld [vmem:[%s9] sm:$0x3]
    %v1547 = vlaneseq
    %v1548 = vshrl.u32 %v1547, 7
    %v1549 = vsub.s32 0, %v1548
    %v1550 = vrot.slane %v1545, %v1549
    %v1551 = vlaneseq
    %v1552 = vshrl.u32 %v1551, 7
    %v1553 = vsub.s32 1, %v1552
    %v1554 = vrot.slane %v1545, %v1553
    %v1557 = vadd.f32 %v1537, %v1550
    %v1558 = vadd.f32 %v1538, %v1554
    %v1559 = vadd.f32 %v1539, %v1550
    %v1560 = vadd.f32 %v1540, %v1554
    %v1561 = vadd.f32 %v1541, %v1550
    %v1562 = vadd.f32 %v1542, %v1554
    %v1563 = vadd.f32 %v1543, %v1550
    %v1564 = vadd.f32 %v1544, %v1554
    %v1565 = vmax.f32 %v1557, 0.0
    %v1566 = vmax.f32 %v1558, 0.0
    %v1567 = vmax.f32 %v1559, 0.0
    %v1568 = vmax.f32 %v1560, 0.0
    %v1569 = vmax.f32 %v1561, 0.0
    %v1570 = vmax.f32 %v1562, 0.0
    %v1571 = vmax.f32 %v1563, 0.0
    %v1572 = vmax.f32 %v1564, 0.0
    %v1573 = vadd.f32 %v1565, %v1567
    %v1574 = vadd.f32 %v1573, %v1569
    %v1575 = vadd.f32 %v1574, %v1571
    %v1576 = vrot.slane %v1575, 4
    %v1577 = vadd.f32 %v1575, %v1576
    %v1578 = vrot.slane %v1577, 2
    %v1579 = vadd.f32 %v1577, %v1578
    %v1580 = vrot.slane %v1579, 1
    %v1581 = vadd.f32 %v1579, %v1580
    %v1582 = vadd.f32 %v1566, %v1568
    %v1583 = vadd.f32 %v1582, %v1570
    %v1584 = vadd.f32 %v1583, %v1572
    %v1585 = vrot.slane %v1584, 4
    %v1586 = vadd.f32 %v1584, %v1585
    %v1587 = vrot.slane %v1586, 2
    %v1588 = vadd.f32 %v1586, %v1587
    %v1589 = vrot.slane %v1588, 1
    %v1590 = vadd.f32 %v1588, %v1589
    %v1591 = vmul.f32 %v1565, %v1565
    %v1592 = vmul.f32 %v1566, %v1566
    %v1593 = vmul.f32 %v1567, %v1567
    %v1594 = vmul.f32 %v1568, %v1568
    %v1595 = vmul.f32 %v1569, %v1569
    %v1596 = vmul.f32 %v1570, %v1570
    %v1597 = vmul.f32 %v1571, %v1571
    %v1598 = vmul.f32 %v1572, %v1572
    %v1599 = vadd.f32 %v1591, %v1593
    %v1600 = vadd.f32 %v1599, %v1595
    %v1601 = vadd.f32 %v1600, %v1597
    %v1602 = vrot.slane %v1601, 4
    %v1603 = vadd.f32 %v1601, %v1602
    %v1604 = vrot.slane %v1603, 2
    %v1605 = vadd.f32 %v1603, %v1604
    %v1606 = vrot.slane %v1605, 1
    %v1607 = vadd.f32 %v1605, %v1606
    %v1608 = vadd.f32 %v1592, %v1594
    %v1609 = vadd.f32 %v1608, %v1596
    %v1610 = vadd.f32 %v1609, %v1598
    %v1611 = vrot.slane %v1610, 4
    %v1612 = vadd.f32 %v1610, %v1611
    %v1613 = vrot.slane %v1612, 2
    %v1614 = vadd.f32 %v1612, %v1613
    %v1615 = vrot.slane %v1614, 1
    %v1616 = vadd.f32 %v1614, %v1615
    %v1617 = vsel %vm107, %v1581, %v1607
    %v1618 = vsel %vm107, %v1590, %v1616
    %v1619 = vld [vmem:[#allocation4] sm:$0xff]
    %v1620 = vld [vmem:[#allocation4 + $0x8] sm:$0xff]
    %v1621 = vld [vmem:[#allocation4 + $0x10] sm:$0xff]
    %v1622 = vld [vmem:[#allocation4 + $0x18] sm:$0xff]
    %v1623 = vld [vmem:[#allocation4 + $0x20] sm:$0xff]
    %v1624 = vld [vmem:[#allocation4 + $0x28] sm:$0xff]
    %v1625 = vld [vmem:[#allocation4 + $0x30] sm:$0xff]
    %v1626 = vld [vmem:[#allocation4 + $0x38] sm:$0xff]
    %v1627 = vld [vmem:[#allocation4 + $0x40] sm:$0xff]
    %v1628 = vld [vmem:[#allocation4 + $0x48] sm:$0xff]
    %v1629 = vld [vmem:[#allocation4 + $0x50] sm:$0xff]
    %v1630 = vld [vmem:[#allocation4 + $0x58] sm:$0xff]
    %v1631 = vld [vmem:[#allocation4 + $0x60] sm:$0xff]
    %v1632 = vld [vmem:[#allocation4 + $0x68] sm:$0xff]
    %v1633 = vld [vmem:[#allocation4 + $0x70] sm:$0xff]
    %v1634 = vld [vmem:[#allocation4 + $0x78] sm:$0xff]
    %v1635 = vld [vmem:[#allocation4 + $0x80] sm:$0xff]
    %v1636 = vld [vmem:[#allocation4 + $0x88] sm:$0xff]
    %v1637 = vld [vmem:[#allocation4 + $0x90] sm:$0xff]
    %v1638 = vld [vmem:[#allocation4 + $0x98] sm:$0xff]
    %v1639 = vld [vmem:[#allocation4 + $0xa0] sm:$0xff]
    %v1640 = vld [vmem:[#allocation4 + $0xa8] sm:$0xff]
    %v1641 = vld [vmem:[#allocation4 + $0xb0] sm:$0xff]
    %v1642 = vld [vmem:[#allocation4 + $0xb8] sm:$0xff]
    %v1643 = vld [vmem:[#allocation4 + $0xc0] sm:$0xff]
    %v1644 = vld [vmem:[#allocation4 + $0xc8] sm:$0xff]
    %v1645 = vld [vmem:[#allocation4 + $0xd0] sm:$0xff]
    %v1646 = vld [vmem:[#allocation4 + $0xd8] sm:$0xff]
    %v1647 = vld [vmem:[#allocation4 + $0xe0] sm:$0xff]
    %v1648 = vld [vmem:[#allocation4 + $0xe8] sm:$0xff]
    %v1649 = vld [vmem:[#allocation4 + $0xf0] sm:$0xff]
    %v1650 = vld [vmem:[#allocation4 + $0xf8] sm:$0xff]
    %v1651 = vld [vmem:[#allocation4 + $0x100] sm:$0xff]
    %v1652 = vld [vmem:[#allocation4 + $0x108] sm:$0xff]
    %v1653 = vld [vmem:[#allocation4 + $0x110] sm:$0xff]
    %v1654 = vld [vmem:[#allocation4 + $0x118] sm:$0xff]
    %v1655 = vld [vmem:[#allocation4 + $0x120] sm:$0xff]
    %v1656 = vld [vmem:[#allocation4 + $0x128] sm:$0xff]
    %v1657 = vld [vmem:[#allocation4 + $0x130] sm:$0xff]
    %v1658 = vld [vmem:[#allocation4 + $0x138] sm:$0xff]
    %v1659 = vld [vmem:[#allocation4 + $0x140] sm:$0xff]
    %v1660 = vld [vmem:[#allocation4 + $0x148] sm:$0xff]
    %v1661 = vld [vmem:[#allocation4 + $0x150] sm:$0xff]
    %v1662 = vld [vmem:[#allocation4 + $0x158] sm:$0xff]
    %v1663 = vld [vmem:[#allocation4 + $0x160] sm:$0xff]
    %v1664 = vld [vmem:[#allocation4 + $0x168] sm:$0xff]
    %v1665 = vld [vmem:[#allocation4 + $0x170] sm:$0xff]
    %v1666 = vld [vmem:[#allocation4 + $0x178] sm:$0xff]
    %v1667 = vld [vmem:[#allocation4 + $0x180] sm:$0xff]
    %v1668 = vld [vmem:[#allocation4 + $0x188] sm:$0xff]
    %v1669 = vld [vmem:[#allocation4 + $0x190] sm:$0xff]
    %v1670 = vld [vmem:[#allocation4 + $0x198] sm:$0xff]
    %v1671 = vld [vmem:[#allocation4 + $0x1a0] sm:$0xff]
    %v1672 = vld [vmem:[#allocation4 + $0x1a8] sm:$0xff]
    %v1673 = vld [vmem:[#allocation4 + $0x1b0] sm:$0xff]
    %v1674 = vld [vmem:[#allocation4 + $0x1b8] sm:$0xff]
    %v1675 = vld [vmem:[#allocation4 + $0x1c0] sm:$0xff]
    %v1676 = vld [vmem:[#allocation4 + $0x1c8] sm:$0xff]
    %v1677 = vld [vmem:[#allocation4 + $0x1d0] sm:$0xff]
    %v1678 = vld [vmem:[#allocation4 + $0x1d8] sm:$0xff]
    %v1679 = vld [vmem:[#allocation4 + $0x1e0] sm:$0xff]
    %v1680 = vld [vmem:[#allocation4 + $0x1e8] sm:$0xff]
    %v1681 = vld [vmem:[#allocation4 + $0x1f0] sm:$0xff]
    %v1682 = vld [vmem:[#allocation4 + $0x1f8] sm:$0xff]
    %1683 = vmatprep.subr.mxu0 %v1620
    %1684 = vmatpush1.msra.mxu0 %v1619
    %1685 = vmatprep.subr.mxu0 %v1622
    %1686 = vmatpush1.msra.mxu0 %v1621
    %1687 = vmatprep.subr.mxu0 %v1624
    %1688 = vmatpush1.msra.mxu0 %v1623
    %1689 = vmatprep.subr.mxu0 %v1626
    %1690 = vmatpush1.msra.mxu0 %v1625
    %1691 = vmatprep.subr.mxu0 %v1628
    %1692 = vmatpush1.msra.mxu0 %v1627
    %1693 = vmatprep.subr.mxu0 %v1630
    %1694 = vmatpush1.msra.mxu0 %v1629
    %1695 = vmatprep.subr.mxu0 %v1632
    %1696 = vmatpush1.msra.mxu0 %v1631
    %1697 = vmatprep.subr.mxu0 %v1634
    %1698 = vmatpush1.msra.mxu0 %v1633
    %1699 = vmatprep.subr.mxu0 %v1636
    %1700 = vmatpush1.msra.mxu0 %v1635
    %1701 = vmatprep.subr.mxu0 %v1638
    %1702 = vmatpush1.msra.mxu0 %v1637
    %1703 = vmatprep.subr.mxu0 %v1640
    %1704 = vmatpush1.msra.mxu0 %v1639
    %1705 = vmatprep.subr.mxu0 %v1642
    %1706 = vmatpush1.msra.mxu0 %v1641
    %1707 = vmatprep.subr.mxu0 %v1644
    %1708 = vmatpush1.msra.mxu0 %v1643
    %1709 = vmatprep.subr.mxu0 %v1646
    %1710 = vmatpush1.msra.mxu0 %v1645
    %1711 = vmatprep.subr.mxu0 %v1648
    %1712 = vmatpush1.msra.mxu0 %v1647
    %1713 = vmatprep.subr.mxu0 %v1650
    %1714 = vmatpush1.msra.mxu0 %v1649
    %1715 = vmatprep.subr.mxu0 %v1652
    %1716 = vmatpush1.msra.mxu0 %v1651
    %1717 = vmatprep.subr.mxu0 %v1654
    %1718 = vmatpush1.msra.mxu0 %v1653
    %1719 = vmatprep.subr.mxu0 %v1656
    %1720 = vmatpush1.msra.mxu0 %v1655
    %1721 = vmatprep.subr.mxu0 %v1658
    %1722 = vmatpush1.msra.mxu0 %v1657
    %1723 = vmatprep.subr.mxu0 %v1660
    %1724 = vmatpush1.msra.mxu0 %v1659
    %1725 = vmatprep.subr.mxu0 %v1662
    %1726 = vmatpush1.msra.mxu0 %v1661
    %1727 = vmatprep.subr.mxu0 %v1664
    %1728 = vmatpush1.msra.mxu0 %v1663
    %1729 = vmatprep.subr.mxu0 %v1666
    %1730 = vmatpush1.msra.mxu0 %v1665
    %1731 = vmatprep.subr.mxu0 %v1668
    %1732 = vmatpush1.msra.mxu0 %v1667
    %1733 = vmatprep.subr.mxu0 %v1670
    %1734 = vmatpush1.msra.mxu0 %v1669
    %1735 = vmatprep.subr.mxu0 %v1672
    %1736 = vmatpush1.msra.mxu0 %v1671
    %1737 = vmatprep.subr.mxu0 %v1674
    %1738 = vmatpush1.msra.mxu0 %v1673
    %1739 = vmatprep.subr.mxu0 %v1676
    %1740 = vmatpush1.msra.mxu0 %v1675
    %1741 = vmatprep.subr.mxu0 %v1678
    %1742 = vmatpush1.msra.mxu0 %v1677
    %1743 = vmatprep.subr.mxu0 %v1680
    %1744 = vmatpush1.msra.mxu0 %v1679
    %1745 = vmatprep.subr.mxu0 %v1682
    %1746 = vmatpush1.msra.mxu0 %v1681
    %1747 = vmatprep.mubr.f32.mxu0 %v1618
    %1748 = vmatmul.mubr.f32.gmra.mrb[0].mxu0 %v1617
    %v1749 = vpop.f32.mrb[0].mxu0
    %v1750 = vadd.f32 0.0, %v1749
    %v1751 = vpop.f32.mrb[0].mxu0
    %v1752 = vadd.f32 0.0, %v1751
    %1753 = vdwg.mxu0
    %v1754 = vmul.f32 %v1750, 0.001953125
    %v1755 = vmul.f32 %v1752, 0.001953125
    %v1756 = vmul.f32 %v1754, %v1754
    %v1757 = vmul.f32 %v1755, %v1755
    %v1760 = vrot.slane %v1756, 7
    %v1761 = vrot.slane %v1757, 7
    %v1764 = vsub.f32 %v1754, %v1760
    %v1765 = vsub.f32 %v1755, %v1761
    %v1766 = vmax.f32 %v1764, 0.0
    %v1767 = vmax.f32 %v1765, 0.0
    %v1768 = vlaneseq
    %v1769 = vshrl.u32 %v1768, 7
    %v1770 = vsub.s32 0, %v1769
    %v1771 = vrot.slane %v1754, %v1770
    %v1772 = vlaneseq
    %v1773 = vshrl.u32 %v1772, 7
    %v1774 = vsub.s32 0, %v1773
    %v1775 = vrot.slane %v1755, %v1774
    %v1776 = vsub.f32 %v1565, %v1771
    %v1777 = vsub.f32 %v1566, %v1775
    %v1778 = vsub.f32 %v1567, %v1771
    %v1779 = vsub.f32 %v1568, %v1775
    %v1780 = vsub.f32 %v1569, %v1771
    %v1781 = vsub.f32 %v1570, %v1775
    %v1782 = vsub.f32 %v1571, %v1771
    %v1783 = vsub.f32 %v1572, %v1775
    %v1784 = vld [vmem:[%s10] sm:$0x3]
    %v1785 = vadd.f32 %v1766, 1e-05
    %v1786 = vadd.f32 %v1767, 1e-05
    %v1787 = vrsqrt.pop %v1785
    %v1788 = vrsqrt.pop %v1786
    %v1791 = vcombine.low %v1787, %v1788
    %v1793 = vunpack.c.l.s4 1966171168
    %v1794 = vunpack.c.0.s8 %v1793
    %v1795 = vlaneseq
    %v1796 = vshrl.u32 %v1795, 7
    %v1797 = vsub.s32 %v1794, %v1796
    %v1798 = vrot.slane %v1791, %v1797
    %v1799 = vcombine.high %v1798, %v1798
    %v1801 = vunpack.c.l.s4 1966171168
    %v1802 = vunpack.c.0.s8 %v1801
    %v1803 = vlaneseq
    %v1804 = vshrl.u32 %v1803, 7
    %v1805 = vsub.s32 %v1802, %v1804
    %v1806 = vrot.slane %v1799, %v1805
    %v1808 = vmul.f32 %v1784, %v1806
    %v1810 = vlaneseq
    %v1811 = vshrl.u32 %v1810, 7
    %v1812 = vsub.s32 0, %v1811
    %v1813 = vrot.slane %v1808, %v1812
    %v1814 = vlaneseq
    %v1815 = vshrl.u32 %v1814, 7
    %v1816 = vsub.s32 1, %v1815
    %v1817 = vrot.slane %v1808, %v1816
    %v1820 = vmul.f32 %v1776, %v1813
    %v1821 = vmul.f32 %v1777, %v1817
    %v1822 = vmul.f32 %v1778, %v1813
    %v1823 = vmul.f32 %v1779, %v1817
    %v1824 = vmul.f32 %v1780, %v1813
    %v1825 = vmul.f32 %v1781, %v1817
    %v1826 = vmul.f32 %v1782, %v1813
    %v1827 = vmul.f32 %v1783, %v1817
    %v1828 = vld [vmem:[%s11] sm:$0x3]
    %v1830 = vlaneseq
    %v1831 = vshrl.u32 %v1830, 7
    %v1832 = vsub.s32 0, %v1831
    %v1833 = vrot.slane %v1828, %v1832
    %v1834 = vlaneseq
    %v1835 = vshrl.u32 %v1834, 7
    %v1836 = vsub.s32 1, %v1835
    %v1837 = vrot.slane %v1828, %v1836
    %v1840 = vadd.f32 %v1820, %v1833
    %v1841 = vadd.f32 %v1821, %v1837
    %v1842 = vadd.f32 %v1822, %v1833
    %v1843 = vadd.f32 %v1823, %v1837
    %v1844 = vadd.f32 %v1824, %v1833
    %v1845 = vadd.f32 %v1825, %v1837
    %v1846 = vadd.f32 %v1826, %v1833
    %v1847 = vadd.f32 %v1827, %v1837
    %v1848 = vmax.f32 %v1840, 0.0
    %v1849 = vmax.f32 %v1841, 0.0
    %v1850 = vmax.f32 %v1842, 0.0
    %v1851 = vmax.f32 %v1843, 0.0
    %v1852 = vmax.f32 %v1844, 0.0
    %v1853 = vmax.f32 %v1845, 0.0
    %v1854 = vmax.f32 %v1846, 0.0
    %v1855 = vmax.f32 %v1847, 0.0
    %1856 = vst [vmem:[%s13] sm:$0xff] %v1848
    %1857 = vst [vmem:[%s13 + $0x8] sm:$0xff] %v1849
    %1858 = vst [vmem:[%s13 + $0x10] sm:$0xff] %v1850
    %1859 = vst [vmem:[%s13 + $0x18] sm:$0xff] %v1851
    %1860 = vst [vmem:[%s13 + $0x20] sm:$0xff] %v1852
    %1861 = vst [vmem:[%s13 + $0x28] sm:$0xff] %v1853
    %1862 = vst [vmem:[%s13 + $0x30] sm:$0xff] %v1854
    %1863 = vst [vmem:[%s13 + $0x38] sm:$0xff] %v1855
    // Predicated region
    $region62: #{up_block_forward.1} parent=1 // pred_check
      _
    $region63: #{up_block_forward.1} parent=1 // pred_check_branch
      %1865 = sbr.rel (0) target = $region65
    $region64: #{up_block_forward.1} parent=1 // pred_region
      _
    $region65: #{up_block_forward.1} parent=1 // pred_fallthru
      _
    // Predicated region
    $region66: #{up_block_forward.1} parent=1 // pred_check
      _
    $region67: #{up_block_forward.1} parent=1 // pred_check_branch
      %1867 = sbr.rel (0) target = $region69
    $region68: #{up_block_forward.1} parent=1 // pred_region
      _
    $region69: #{up_block_forward.1} parent=1 // pred_fallthru
      _
    %1868 = vsyncpa [#allocation3], 1
    %1869 = vsyncpa [#allocation5], 1

</llo_original>
